<compile_context>
chip_gen: v6e
topology: v6e:2x2x1
jax: 0.10.0
libtpu: 0.0.40
codegen_flags: <defaults>
</compile_context>

<pallas_src>
import math
from functools import partial

import numpy as np
import jax
import jax.numpy as jnp
from jax.experimental import pallas as pl
from jax.experimental.pallas import tpu as pltpu


def _block_kernel(scale, n_head, q_len,
                  x_ref, mask_ref, shiftm_ref,
                  wv_ref, bv_ref, wqk_ref, bqk_ref,
                  wproj_ref, bproj_ref, g1_ref, b1_ref,
                  wfc_ref, bfc_ref, wp2_ref, bp2_ref, g2_ref, b2_ref,
                  o_ref):
    rows, E = x_ref.shape                 # rows = batch_block * T
    H = n_head
    HE = H * E
    cdt = wv_ref.dtype                    # matmul operand dtype (f32 or bf16)

    x = x_ref[...].astype(jnp.float32)    # (rows, E); elementwise tail stays f32
    xm = x.astype(cdt)

    # ---- Attention.value : Conv1D(rf=1) -> (rows, H*E)
    v = jnp.dot(xm, wv_ref[...], preferred_element_type=jnp.float32) + bv_ref[...]

    # ---- Attention.query_key : causal q_len-tap Conv1d accumulated in-kernel.
    # Tap q_len-1 needs no shift; tap kk < q_len-1 uses a precomputed 0/1 shift
    # matrix that moves rows down by (q_len-1-kk) within each batch element and
    # zeroes the invalid leading rows (so no unfolded (rows, q_len*E) HBM input).
    wqk = wqk_ref[...]                    # (q_len*E, 2*H*E)
    qk = jnp.dot(xm, wqk[(q_len - 1) * E:, :],
                 preferred_element_type=jnp.float32) + bqk_ref[...]
    for kk in range(q_len - 1):
        xs = jnp.dot(shiftm_ref[kk], x, preferred_element_type=jnp.float32)
        qk = qk + jnp.dot(xs.astype(cdt), wqk[kk * E:(kk + 1) * E, :],
                          preferred_element_type=jnp.float32)

    q = qk[:, :HE]
    k = qk[:, HE:]

    # ---- split heads once into a leading axis -> batched einsums on the MXU
    qh = jnp.stack([q[:, h * E:(h + 1) * E] for h in range(H)], axis=0).astype(cdt)
    kh = jnp.stack([k[:, h * E:(h + 1) * E] for h in range(H)], axis=0).astype(cdt)
    vh = jnp.stack([v[:, h * E:(h + 1) * E] for h in range(H)], axis=0).astype(cdt)

    s = jnp.einsum('hqe,hke->hqk', qh, kh,
                   preferred_element_type=jnp.float32)      # (H, rows, rows)
    if scale:
        s = s * (1.0 / math.sqrt(E))

    # ---- block-diagonal causal mask: single vselect instead of
    #      s*mask + (-1e9)*(1-mask)
    keep = mask_ref[...] != 0.0           # (rows, rows) bool
    s = jnp.where(keep[None, :, :], s, -1e9)

    # ---- softmax: exp on EUP, approx reciprocal + one Newton step (~f32 exact)
    s = s - jnp.max(s, axis=-1, keepdims=True)
    e = jnp.exp(s)
    den = jnp.sum(e, axis=-1, keepdims=True)
    inv = pl.reciprocal(den, approx=True)
    inv = inv * (2.0 - den * inv)
    p = e * inv

    att = jnp.einsum('hqk,hke->hqe', p.astype(cdt), vh,
                     preferred_element_type=jnp.float32)    # (H, rows, E)

    # ---- Attention.c_proj folded per head:
    #      merge_heads(att) @ Wproj == sum_h att_h @ Wproj[h*E:(h+1)*E]
    # (removes the lane-axis concat of head outputs entirely)
    wproj = wproj_ref[...]
    proj = jnp.dot(att[0].astype(cdt), wproj[:E, :],
                   preferred_element_type=jnp.float32)
    for h in range(1, H):
        proj = proj + jnp.dot(att[h].astype(cdt), wproj[h * E:(h + 1) * E, :],
                              preferred_element_type=jnp.float32)
    proj = proj + bproj_ref[...]

    # ---- residual + LayerNorm 1 (OpenAI style, eps inside sqrt)
    z1 = x + proj
    mu1 = jnp.mean(z1, axis=-1, keepdims=True)
    d1 = z1 - mu1
    ln1 = (g1_ref[...] *
           (d1 * jax.lax.rsqrt(jnp.mean(d1 * d1, axis=-1, keepdims=True) + 1e-5))
           + b1_ref[...])

    # ---- MLP : c_fc -> ReLU -> c_proj
    h1 = jnp.dot(ln1.astype(cdt), wfc_ref[...],
                 preferred_element_type=jnp.float32) + bfc_ref[...]
    h1 = jnp.maximum(h1, 0.0)
    h2 = jnp.dot(h1.astype(cdt), wp2_ref[...],
                 preferred_element_type=jnp.float32) + bp2_ref[...]

    # ---- residual + LayerNorm 2
    z2 = ln1 + h2
    mu2 = jnp.mean(z2, axis=-1, keepdims=True)
    d2 = z2 - mu2
    out = (g2_ref[...] *
           (d2 * jax.lax.rsqrt(jnp.mean(d2 * d2, axis=-1, keepdims=True) + 1e-5))
           + b2_ref[...])

    # single 2-D slab store (one unmasked-as-possible write per grid step)
    o_ref[...] = out.astype(o_ref.dtype)


def prepare_params(params, *, n_head, n_embd, q_len, matmul_dtype=jnp.float32):
    """One-time parameter prep (hoisted out of the per-call path): conv weight
    -> (q_len*E, 2*H*E) matmul layout, bias/LN reshapes, matmul-weight dtype cast
    (bf16 recommended on v5e/v6e/v7x MXU; biases/LN params stay f32)."""
    E, H, QL = n_embd, n_head, q_len
    HE = H * E
    NS = params["wfc"].shape[1]
    f32 = jnp.float32
    wqk2d = jnp.transpose(params["w_qk_conv"], (2, 1, 0)).reshape(QL * E, 2 * HE)
    return {
        "wv": params["wv"].astype(matmul_dtype),
        "bv": params["bv"].reshape(1, HE).astype(f32),
        "wqk": wqk2d.astype(matmul_dtype),
        "bqk": params["b_qk_conv"].reshape(1, 2 * HE).astype(f32),
        "wproj": params["wproj"].astype(matmul_dtype),
        "bproj": params["bproj"].reshape(1, E).astype(f32),
        "g1": params["g1"].reshape(1, E).astype(f32),
        "b1": params["b1"].reshape(1, E).astype(f32),
        "wfc": params["wfc"].astype(matmul_dtype),
        "bfc": params["bfc"].reshape(1, NS).astype(f32),
        "wp2": params["wp2"].astype(matmul_dtype),
        "bp2": params["bp2"].reshape(1, E).astype(f32),
        "g2": params["g2"].reshape(1, E).astype(f32),
        "b2": params["b2"].reshape(1, E).astype(f32),
    }


def _aux_masks(rows, T, q_len):
    """Block-diagonal causal keep-mask over the fused batch*time rows (the
    analogue of the PyTorch module's registered tril buffer) and the per-tap
    0/1 shift matrices for the causal conv.  Built once with numpy."""
    t = np.arange(rows, dtype=np.int64) % T
    b = np.arange(rows, dtype=np.int64) // T
    keep = ((b[:, None] == b[None, :]) &
            (t[:, None] >= t[None, :])).astype(np.float32)
    n_shift = max(q_len - 1, 1)
    smats = np.zeros((n_shift, rows, rows), np.float32)
    for kk in range(q_len - 1):
        shift = q_len - 1 - kk
        for r in range(rows):
            if t[r] >= shift:
                smats[kk, r, r - shift] = 1.0
    return jnp.asarray(keep), jnp.asarray(smats)


def block_forward(x, y, prep, *, n_head, q_len, scale=True, use_gcn=False,
                  batch_block=None):
    """Pallas implementation of Block.forward(x, y) for use_gcn=False (y unused)."""
    del y  # unused on the non-GCN path (matches the PyTorch module)
    assert not use_gcn, "use_gcn=True path not implemented"
    B, T, E = x.shape

    if batch_block is None:
        batch_block = B               # one grid step at small sizes
    assert B % batch_block == 0
    rows = batch_block * T
    grid = (B // batch_block,)

    keep_mask, shift_mats = _aux_masks(rows, T, q_len)
    x2 = x.reshape(B * T, E)          # fused (batch*time) rows, lane-dense E

    def _full(a):
        zeros = (0,) * a.ndim
        return pl.BlockSpec(a.shape, lambda i, _z=zeros: _z)

    weights = (prep["wv"], prep["bv"], prep["wqk"], prep["bqk"],
               prep["wproj"], prep["bproj"], prep["g1"], prep["b1"],
               prep["wfc"], prep["bfc"], prep["wp2"], prep["bp2"],
               prep["g2"], prep["b2"])

    # Weights/masks are grid-invariant; with grid=(1,) here, double-buffering
    # overhead is nil (at larger grids they could be single-buffered).
    in_specs = ([pl.BlockSpec((rows, E), lambda i: (i, 0)),
                 _full(keep_mask), _full(shift_mats)]
                + [_full(w) for w in weights])
    out_specs = pl.BlockSpec((rows, E), lambda i: (i, 0))

    out2 = pl.pallas_call(
        partial(_block_kernel, scale, n_head, q_len),
        out_shape=jax.ShapeDtypeStruct((B * T, E), x.dtype),
        grid_spec=pltpu.PrefetchScalarGridSpec(
            num_scalar_prefetch=0,
            grid=grid,
            in_specs=in_specs,
            out_specs=out_specs,
        ),
        # row-block axis is independent -> shards across TensorCores when grid > 1
        compiler_params=pltpu.CompilerParams(dimension_semantics=("parallel",)),
    )(x2, keep_mask, shift_mats, *weights)
    return out2.reshape(B, T, E)


def init_params(key, n_head, n_embd, q_len):
    E, H, QL = n_embd, n_head, q_len
    HE = H * E
    NS = 4 * E
    ks = jax.random.split(key, 6)
    std = 0.02
    return {
        # Attention.value : Conv1D(HE, rf=1, E)
        "wv": std * jax.random.normal(ks[0], (E, HE), jnp.float32),
        "bv": jnp.zeros((HE,), jnp.float32),
        # Attention.query_key : nn.Conv1d(E, 2*HE, q_len)
        "w_qk_conv": std * jax.random.normal(ks[1], (2 * HE, E, QL), jnp.float32),
        "b_qk_conv": std * jax.random.normal(ks[2], (2 * HE,), jnp.float32),
        # Attention.c_proj : Conv1D(E, rf=1, HE)
        "wproj": std * jax.random.normal(ks[3], (HE, E), jnp.float32),
        "bproj": jnp.zeros((E,), jnp.float32),
        # LayerNorm 1
        "g1": jnp.ones((E,), jnp.float32),
        "b1": jnp.zeros((E,), jnp.float32),
        # MLP
        "wfc": std * jax.random.normal(ks[4], (E, NS), jnp.float32),
        "bfc": jnp.zeros((NS,), jnp.float32),
        "wp2": std * jax.random.normal(ks[5], (NS, E), jnp.float32),
        "bp2": jnp.zeros((E,), jnp.float32),
        # LayerNorm 2
        "g2": jnp.ones((E,), jnp.float32),
        "b2": jnp.zeros((E,), jnp.float32),
    }


def reference_forward(x, params, *, n_head, q_len, scale=True):
    """Pure-JAX mirror of the PyTorch Block.forward (use_gcn=False, eval mode)."""
    B, T, E = x.shape
    HE = n_head * E
    v = x @ params["wv"] + params["bv"]
    xp = jnp.pad(x, ((0, 0), (q_len - 1, 0), (0, 0)))
    stacked = jnp.stack([xp[:, kk:kk + T, :] for kk in range(q_len)], axis=2)
    qk = jnp.einsum("btkc,ock->bto", stacked, params["w_qk_conv"]) + params["b_qk_conv"]
    q, k = qk[..., :HE], qk[..., HE:]
    qh = q.reshape(B, T, n_head, E).transpose(0, 2, 1, 3)
    kh = k.reshape(B, T, n_head, E).transpose(0, 2, 3, 1)
    vh = v.reshape(B, T, n_head, E).transpose(0, 2, 1, 3)
    pre = jnp.matmul(qh, kh)
    if scale:
        pre = pre / math.sqrt(E)
    mask = jnp.tril(jnp.ones((T, T), jnp.float32))
    pre = pre * mask + (-1e9) * (1.0 - mask)
    att = jax.nn.softmax(pre, axis=-1)
    att = jnp.matmul(att, vh).transpose(0, 2, 1, 3).reshape(B, T, HE)
    att = att @ params["wproj"] + params["bproj"]

    def ln(z, g, b):
        mu = z.mean(-1, keepdims=True)
        sig = ((z - mu) ** 2).mean(-1, keepdims=True)
        return g * (z - mu) / jnp.sqrt(sig + 1e-5) + b

    ln1 = ln(x + att, params["g1"], params["b1"])
    h1 = jnp.maximum(ln1 @ params["wfc"] + params["bfc"], 0.0)
    h2 = h1 @ params["wp2"] + params["bp2"]
    return ln(ln1 + h2, params["g2"], params["b2"])


if __name__ == "__main__":
    # Block(n_head=4, win_len=8, n_embd=32, scale=True, q_len=2, use_gcn=False)
    n_head, win_len, n_embd, q_len = 4, 8, 32, 2
    B = 2

    key = jax.random.PRNGKey(0)
    kx, ky, kp = jax.random.split(key, 3)
    x = jax.random.normal(kx, (B, win_len, n_embd), jnp.float32)
    y = jax.random.normal(ky, (win_len, win_len), jnp.float32)  # unused (use_gcn=False)
    params = init_params(kp, n_head, n_embd, q_len)

    ref = reference_forward(x, params, n_head=n_head, q_len=q_len, scale=True)

    # f32 matmul path: must match the PyTorch-style reference tightly.
    prep32 = prepare_params(params, n_head=n_head, n_embd=n_embd, q_len=q_len,
                            matmul_dtype=jnp.float32)
    out32 = jax.block_until_ready(
        block_forward(x, y, prep32, n_head=n_head, q_len=q_len,
                      scale=True, use_gcn=False))
    assert out32.shape == (B, win_len, n_embd)
    assert jnp.allclose(out32, ref, rtol=1e-4, atol=1e-4), \
        "f32 kernel mismatch vs reference"

    # bf16 matmul operands (f32 accumulation) -- MXU-native path on v5e/v6e/v7x.
    prepbf16 = prepare_params(params, n_head=n_head, n_embd=n_embd, q_len=q_len,
                              matmul_dtype=jnp.bfloat16)
    outbf16 = jax.block_until_ready(
        block_forward(x, y, prepbf16, n_head=n_head, q_len=q_len,
                      scale=True, use_gcn=False))
    assert jnp.allclose(outbf16, ref, rtol=5e-2, atol=5e-2), \
        "bf16 kernel mismatch vs reference"

    print("KERNEL_OK")
</pallas_src>

<mosaic_0001>
module attributes {stable_mosaic.version = 11 : i64} {
  func.func @_block_kernel(%arg0: i32, %arg1: memref<16x32xf32, #tpu.memory_space<vmem>>, %arg2: memref<16x16xf32, #tpu.memory_space<vmem>>, %arg3: memref<1x16x16xf32, #tpu.memory_space<vmem>>, %arg4: memref<32x128xf32, #tpu.memory_space<vmem>>, %arg5: memref<1x128xf32, #tpu.memory_space<vmem>>, %arg6: memref<64x256xf32, #tpu.memory_space<vmem>>, %arg7: memref<1x256xf32, #tpu.memory_space<vmem>>, %arg8: memref<128x32xf32, #tpu.memory_space<vmem>>, %arg9: memref<1x32xf32, #tpu.memory_space<vmem>>, %arg10: memref<1x32xf32, #tpu.memory_space<vmem>>, %arg11: memref<1x32xf32, #tpu.memory_space<vmem>>, %arg12: memref<32x128xf32, #tpu.memory_space<vmem>>, %arg13: memref<1x128xf32, #tpu.memory_space<vmem>>, %arg14: memref<128x32xf32, #tpu.memory_space<vmem>>, %arg15: memref<1x32xf32, #tpu.memory_space<vmem>>, %arg16: memref<1x32xf32, #tpu.memory_space<vmem>>, %arg17: memref<1x32xf32, #tpu.memory_space<vmem>>, %arg18: memref<16x32xf32, #tpu.memory_space<vmem>>) attributes {dimension_semantics = [#tpu.dimension_semantics<parallel>], iteration_bounds = array<i64: 1>, scalar_prefetch = 0 : i64, scratch_operands = 0 : i64, tpu.core_type = #tpu.core_type<tc>, window_params = [{transform_indices = @transform_0, window_bounds = array<i64: 16, 32>}, {pipeline_mode = #tpu.pipeline_mode<synchronous>, transform_indices = @transform_1, window_bounds = array<i64: 16, 16>}, {pipeline_mode = #tpu.pipeline_mode<synchronous>, transform_indices = @transform_2, window_bounds = array<i64: 1, 16, 16>}, {pipeline_mode = #tpu.pipeline_mode<synchronous>, transform_indices = @transform_3, window_bounds = array<i64: 32, 128>}, {pipeline_mode = #tpu.pipeline_mode<synchronous>, transform_indices = @transform_4, window_bounds = array<i64: 1, 128>}, {pipeline_mode = #tpu.pipeline_mode<synchronous>, transform_indices = @transform_5, window_bounds = array<i64: 64, 256>}, {pipeline_mode = #tpu.pipeline_mode<synchronous>, transform_indices = @transform_6, window_bounds = array<i64: 1, 256>}, {pipeline_mode = #tpu.pipeline_mode<synchronous>, transform_indices = @transform_7, window_bounds = array<i64: 128, 32>}, {pipeline_mode = #tpu.pipeline_mode<synchronous>, transform_indices = @transform_8, window_bounds = array<i64: 1, 32>}, {pipeline_mode = #tpu.pipeline_mode<synchronous>, transform_indices = @transform_9, window_bounds = array<i64: 1, 32>}, {pipeline_mode = #tpu.pipeline_mode<synchronous>, transform_indices = @transform_10, window_bounds = array<i64: 1, 32>}, {pipeline_mode = #tpu.pipeline_mode<synchronous>, transform_indices = @transform_11, window_bounds = array<i64: 32, 128>}, {pipeline_mode = #tpu.pipeline_mode<synchronous>, transform_indices = @transform_12, window_bounds = array<i64: 1, 128>}, {pipeline_mode = #tpu.pipeline_mode<synchronous>, transform_indices = @transform_13, window_bounds = array<i64: 128, 32>}, {pipeline_mode = #tpu.pipeline_mode<synchronous>, transform_indices = @transform_14, window_bounds = array<i64: 1, 32>}, {pipeline_mode = #tpu.pipeline_mode<synchronous>, transform_indices = @transform_15, window_bounds = array<i64: 1, 32>}, {pipeline_mode = #tpu.pipeline_mode<synchronous>, transform_indices = @transform_16, window_bounds = array<i64: 1, 32>}, {transform_indices = @transform_17, window_bounds = array<i64: 16, 32>}]} {
    %c0 = arith.constant 0 : index
    %c0_0 = arith.constant 0 : index
    %0 = vector.load %arg1[%c0, %c0_0] : memref<16x32xf32, #tpu.memory_space<vmem>>, vector<16x32xf32>
    %c0_1 = arith.constant 0 : index
    %c0_2 = arith.constant 0 : index
    %1 = vector.load %arg4[%c0_1, %c0_2] : memref<32x128xf32, #tpu.memory_space<vmem>>, vector<32x128xf32>
    %cst = arith.constant dense<0.000000e+00> : vector<16x128xf32>
    %2 = tpu.matmul %0, %1, %cst {dimension_numbers = #tpu.dot_dimension_numbers<[1], [0], [0], [1], [0, 0, 1, 1], [], []>} : vector<16x32xf32>, vector<32x128xf32>, vector<16x128xf32> -> vector<16x128xf32>
    %c0_3 = arith.constant 0 : index
    %c0_4 = arith.constant 0 : index
    %3 = vector.load %arg5[%c0_3, %c0_4] : memref<1x128xf32, #tpu.memory_space<vmem>>, vector<1x128xf32>
    %4 = vector.broadcast %3 : vector<1x128xf32> to vector<16x128xf32>
    %5 = arith.addf %2, %4 : vector<16x128xf32>
    %c0_5 = arith.constant 0 : index
    %c0_6 = arith.constant 0 : index
    %6 = vector.load %arg6[%c0_5, %c0_6] : memref<64x256xf32, #tpu.memory_space<vmem>>, vector<64x256xf32>
    %7 = vector.extract_strided_slice %6 {offsets = [32, 0], sizes = [32, 256], strides = [1, 1]} : vector<64x256xf32> to vector<32x256xf32>
    %cst_7 = arith.constant dense<0.000000e+00> : vector<16x256xf32>
    %8 = tpu.matmul %0, %7, %cst_7 {dimension_numbers = #tpu.dot_dimension_numbers<[1], [0], [0], [1], [0, 0, 1, 1], [], []>} : vector<16x32xf32>, vector<32x256xf32>, vector<16x256xf32> -> vector<16x256xf32>
    %c0_8 = arith.constant 0 : index
    %c0_9 = arith.constant 0 : index
    %9 = vector.load %arg7[%c0_8, %c0_9] : memref<1x256xf32, #tpu.memory_space<vmem>>, vector<1x256xf32>
    %10 = vector.broadcast %9 : vector<1x256xf32> to vector<16x256xf32>
    %11 = arith.addf %8, %10 : vector<16x256xf32>
    %c0_10 = arith.constant 0 : index
    %c0_11 = arith.constant 0 : index
    %c0_12 = arith.constant 0 : index
    %12 = vector.load %arg3[%c0_10, %c0_11, %c0_12] : memref<1x16x16xf32, #tpu.memory_space<vmem>>, vector<1x16x16xf32>
    %13 = vector.shape_cast %12 : vector<1x16x16xf32> to vector<16x16xf32>
    %cst_13 = arith.constant dense<0.000000e+00> : vector<16x32xf32>
    %14 = tpu.matmul %13, %0, %cst_13 {dimension_numbers = #tpu.dot_dimension_numbers<[1], [0], [0], [1], [0, 0, 1, 1], [], []>} : vector<16x16xf32>, vector<16x32xf32>, vector<16x32xf32> -> vector<16x32xf32>
    %15 = vector.extract_strided_slice %6 {offsets = [0, 0], sizes = [32, 256], strides = [1, 1]} : vector<64x256xf32> to vector<32x256xf32>
    %cst_14 = arith.constant dense<0.000000e+00> : vector<16x256xf32>
    %16 = tpu.matmul %14, %15, %cst_14 {dimension_numbers = #tpu.dot_dimension_numbers<[1], [0], [0], [1], [0, 0, 1, 1], [], []>} : vector<16x32xf32>, vector<32x256xf32>, vector<16x256xf32> -> vector<16x256xf32>
    %17 = arith.addf %11, %16 : vector<16x256xf32>
    %18 = vector.extract_strided_slice %17 {offsets = [0, 0], sizes = [16, 128], strides = [1, 1]} : vector<16x256xf32> to vector<16x128xf32>
    %19 = vector.extract_strided_slice %17 {offsets = [0, 128], sizes = [16, 128], strides = [1, 1]} : vector<16x256xf32> to vector<16x128xf32>
    %20 = vector.extract_strided_slice %18 {offsets = [0, 0], sizes = [16, 32], strides = [1, 1]} : vector<16x128xf32> to vector<16x32xf32>
    %21 = vector.extract_strided_slice %18 {offsets = [0, 32], sizes = [16, 32], strides = [1, 1]} : vector<16x128xf32> to vector<16x32xf32>
    %22 = vector.extract_strided_slice %18 {offsets = [0, 64], sizes = [16, 32], strides = [1, 1]} : vector<16x128xf32> to vector<16x32xf32>
    %23 = vector.extract_strided_slice %18 {offsets = [0, 96], sizes = [16, 32], strides = [1, 1]} : vector<16x128xf32> to vector<16x32xf32>
    %24 = vector.shape_cast %20 : vector<16x32xf32> to vector<1x16x32xf32>
    %25 = vector.shape_cast %21 : vector<16x32xf32> to vector<1x16x32xf32>
    %26 = vector.shape_cast %22 : vector<16x32xf32> to vector<1x16x32xf32>
    %27 = vector.shape_cast %23 : vector<16x32xf32> to vector<1x16x32xf32>
    %28 = tpu.concatenate %24, %25, %26, %27 in 0 : vector<1x16x32xf32>, vector<1x16x32xf32>, vector<1x16x32xf32>, vector<1x16x32xf32> -> vector<4x16x32xf32>
    %29 = vector.extract_strided_slice %19 {offsets = [0, 0], sizes = [16, 32], strides = [1, 1]} : vector<16x128xf32> to vector<16x32xf32>
    %30 = vector.extract_strided_slice %19 {offsets = [0, 32], sizes = [16, 32], strides = [1, 1]} : vector<16x128xf32> to vector<16x32xf32>
    %31 = vector.extract_strided_slice %19 {offsets = [0, 64], sizes = [16, 32], strides = [1, 1]} : vector<16x128xf32> to vector<16x32xf32>
    %32 = vector.extract_strided_slice %19 {offsets = [0, 96], sizes = [16, 32], strides = [1, 1]} : vector<16x128xf32> to vector<16x32xf32>
    %33 = vector.shape_cast %29 : vector<16x32xf32> to vector<1x16x32xf32>
    %34 = vector.shape_cast %30 : vector<16x32xf32> to vector<1x16x32xf32>
    %35 = vector.shape_cast %31 : vector<16x32xf32> to vector<1x16x32xf32>
    %36 = vector.shape_cast %32 : vector<16x32xf32> to vector<1x16x32xf32>
    %37 = tpu.concatenate %33, %34, %35, %36 in 0 : vector<1x16x32xf32>, vector<1x16x32xf32>, vector<1x16x32xf32>, vector<1x16x32xf32> -> vector<4x16x32xf32>
    %38 = vector.extract_strided_slice %5 {offsets = [0, 0], sizes = [16, 32], strides = [1, 1]} : vector<16x128xf32> to vector<16x32xf32>
    %39 = vector.extract_strided_slice %5 {offsets = [0, 32], sizes = [16, 32], strides = [1, 1]} : vector<16x128xf32> to vector<16x32xf32>
    %40 = vector.extract_strided_slice %5 {offsets = [0, 64], sizes = [16, 32], strides = [1, 1]} : vector<16x128xf32> to vector<16x32xf32>
    %41 = vector.extract_strided_slice %5 {offsets = [0, 96], sizes = [16, 32], strides = [1, 1]} : vector<16x128xf32> to vector<16x32xf32>
    %42 = vector.shape_cast %38 : vector<16x32xf32> to vector<1x16x32xf32>
    %43 = vector.shape_cast %39 : vector<16x32xf32> to vector<1x16x32xf32>
    %44 = vector.shape_cast %40 : vector<16x32xf32> to vector<1x16x32xf32>
    %45 = vector.shape_cast %41 : vector<16x32xf32> to vector<1x16x32xf32>
    %46 = tpu.concatenate %42, %43, %44, %45 in 0 : vector<1x16x32xf32>, vector<1x16x32xf32>, vector<1x16x32xf32>, vector<1x16x32xf32> -> vector<4x16x32xf32>
    "tpu.trace_start"() <{level = 10 : i32, message = "hqe,hke->hqk"}> : () -> ()
    %cst_15 = arith.constant dense<0.000000e+00> : vector<4x16x16xf32>
    %47 = tpu.matmul %28, %37, %cst_15 {dimension_numbers = #tpu.dot_dimension_numbers<[2], [2], [1], [1], [0, 0, 0, 1, 1, 1], [0], [0]>} : vector<4x16x32xf32>, vector<4x16x32xf32>, vector<4x16x16xf32> -> vector<4x16x16xf32>
    "tpu.trace_stop"() : () -> ()
    %cst_16 = arith.constant 0.176776692 : f32
    %48 = vector.broadcast %cst_16 : f32 to vector<4x16x16xf32>
    %49 = arith.mulf %47, %48 : vector<4x16x16xf32>
    %c0_17 = arith.constant 0 : index
    %c0_18 = arith.constant 0 : index
    %50 = vector.load %arg2[%c0_17, %c0_18] : memref<16x16xf32, #tpu.memory_space<vmem>>, vector<16x16xf32>
    %cst_19 = arith.constant 0.000000e+00 : f32
    %51 = vector.broadcast %cst_19 : f32 to vector<16x16xf32>
    %52 = arith.cmpf one, %50, %51 : vector<16x16xf32>
    %53 = vector.shape_cast %52 : vector<16x16xi1> to vector<1x16x16xi1>
    %cst_20 = arith.constant -1.000000e+09 : f32
    %54 = vector.shape_cast %53 : vector<1x16x16xi1> to vector<1x16x16xi1>
    %55 = vector.broadcast %54 : vector<1x16x16xi1> to vector<4x16x16xi1>
    %56 = vector.broadcast %cst_20 : f32 to vector<4x16x16xf32>
    %57 = arith.select %55, %49, %56 : vector<4x16x16xi1>, vector<4x16x16xf32>
    %cst_21 = arith.constant dense<0xFF800000> : vector<4x16xf32>
    %58 = vector.multi_reduction <maximumf>, %57, %cst_21 [2] : vector<4x16x16xf32> to vector<4x16xf32>
    %59 = vector.shape_cast %58 : vector<4x16xf32> to vector<4x16x1xf32>
    %60 = vector.broadcast %59 : vector<4x16x1xf32> to vector<4x16x16xf32>
    %61 = arith.subf %57, %60 : vector<4x16x16xf32>
    %62 = math.exp %61 : vector<4x16x16xf32>
    %cst_22 = arith.constant dense<0.000000e+00> : vector<4x16xf32>
    %63 = vector.multi_reduction <add>, %62, %cst_22 [2] : vector<4x16x16xf32> to vector<4x16xf32>
    %64 = vector.shape_cast %63 : vector<4x16xf32> to vector<4x16x1xf32>
    %65 = tpu.reciprocal %64 {approx = true} : vector<4x16x1xf32> -> vector<4x16x1xf32>
    %66 = arith.mulf %64, %65 : vector<4x16x1xf32>
    %cst_23 = arith.constant 2.000000e+00 : f32
    %67 = vector.broadcast %cst_23 : f32 to vector<4x16x1xf32>
    %68 = arith.subf %67, %66 : vector<4x16x1xf32>
    %69 = arith.mulf %65, %68 : vector<4x16x1xf32>
    %70 = vector.broadcast %69 : vector<4x16x1xf32> to vector<4x16x16xf32>
    %71 = arith.mulf %62, %70 : vector<4x16x16xf32>
    "tpu.trace_start"() <{level = 10 : i32, message = "hqk,hke->hqe"}> : () -> ()
    %cst_24 = arith.constant dense<0.000000e+00> : vector<4x16x32xf32>
    %72 = tpu.matmul %71, %46, %cst_24 {dimension_numbers = #tpu.dot_dimension_numbers<[2], [1], [1], [2], [0, 0, 0, 1, 1, 2], [0], [0]>} : vector<4x16x16xf32>, vector<4x16x32xf32>, vector<4x16x32xf32> -> vector<4x16x32xf32>
    "tpu.trace_stop"() : () -> ()
    %c0_25 = arith.constant 0 : index
    %c0_26 = arith.constant 0 : index
    %73 = vector.load %arg8[%c0_25, %c0_26] : memref<128x32xf32, #tpu.memory_space<vmem>>, vector<128x32xf32>
    %74 = vector.extract_strided_slice %72 {offsets = [0, 0, 0], sizes = [1, 16, 32], strides = [1, 1, 1]} : vector<4x16x32xf32> to vector<1x16x32xf32>
    %75 = vector.shape_cast %74 : vector<1x16x32xf32> to vector<16x32xf32>
    %76 = vector.extract_strided_slice %73 {offsets = [0, 0], sizes = [32, 32], strides = [1, 1]} : vector<128x32xf32> to vector<32x32xf32>
    %cst_27 = arith.constant dense<0.000000e+00> : vector<16x32xf32>
    %77 = tpu.matmul %75, %76, %cst_27 {dimension_numbers = #tpu.dot_dimension_numbers<[1], [0], [0], [1], [0, 0, 1, 1], [], []>} : vector<16x32xf32>, vector<32x32xf32>, vector<16x32xf32> -> vector<16x32xf32>
    %78 = vector.extract_strided_slice %72 {offsets = [1, 0, 0], sizes = [1, 16, 32], strides = [1, 1, 1]} : vector<4x16x32xf32> to vector<1x16x32xf32>
    %79 = vector.shape_cast %78 : vector<1x16x32xf32> to vector<16x32xf32>
    %80 = vector.extract_strided_slice %73 {offsets = [32, 0], sizes = [32, 32], strides = [1, 1]} : vector<128x32xf32> to vector<32x32xf32>
    %cst_28 = arith.constant dense<0.000000e+00> : vector<16x32xf32>
    %81 = tpu.matmul %79, %80, %cst_28 {dimension_numbers = #tpu.dot_dimension_numbers<[1], [0], [0], [1], [0, 0, 1, 1], [], []>} : vector<16x32xf32>, vector<32x32xf32>, vector<16x32xf32> -> vector<16x32xf32>
    %82 = arith.addf %77, %81 : vector<16x32xf32>
    %83 = vector.extract_strided_slice %72 {offsets = [2, 0, 0], sizes = [1, 16, 32], strides = [1, 1, 1]} : vector<4x16x32xf32> to vector<1x16x32xf32>
    %84 = vector.shape_cast %83 : vector<1x16x32xf32> to vector<16x32xf32>
    %85 = vector.extract_strided_slice %73 {offsets = [64, 0], sizes = [32, 32], strides = [1, 1]} : vector<128x32xf32> to vector<32x32xf32>
    %cst_29 = arith.constant dense<0.000000e+00> : vector<16x32xf32>
    %86 = tpu.matmul %84, %85, %cst_29 {dimension_numbers = #tpu.dot_dimension_numbers<[1], [0], [0], [1], [0, 0, 1, 1], [], []>} : vector<16x32xf32>, vector<32x32xf32>, vector<16x32xf32> -> vector<16x32xf32>
    %87 = arith.addf %82, %86 : vector<16x32xf32>
    %88 = vector.extract_strided_slice %72 {offsets = [3, 0, 0], sizes = [1, 16, 32], strides = [1, 1, 1]} : vector<4x16x32xf32> to vector<1x16x32xf32>
    %89 = vector.shape_cast %88 : vector<1x16x32xf32> to vector<16x32xf32>
    %90 = vector.extract_strided_slice %73 {offsets = [96, 0], sizes = [32, 32], strides = [1, 1]} : vector<128x32xf32> to vector<32x32xf32>
    %cst_30 = arith.constant dense<0.000000e+00> : vector<16x32xf32>
    %91 = tpu.matmul %89, %90, %cst_30 {dimension_numbers = #tpu.dot_dimension_numbers<[1], [0], [0], [1], [0, 0, 1, 1], [], []>} : vector<16x32xf32>, vector<32x32xf32>, vector<16x32xf32> -> vector<16x32xf32>
    %92 = arith.addf %87, %91 : vector<16x32xf32>
    %c0_31 = arith.constant 0 : index
    %c0_32 = arith.constant 0 : index
    %93 = vector.load %arg9[%c0_31, %c0_32] : memref<1x32xf32, #tpu.memory_space<vmem>>, vector<1x32xf32>
    %94 = vector.broadcast %93 : vector<1x32xf32> to vector<16x32xf32>
    %95 = arith.addf %92, %94 : vector<16x32xf32>
    %96 = arith.addf %0, %95 : vector<16x32xf32>
    %cst_33 = arith.constant dense<0.000000e+00> : vector<16xf32>
    %97 = vector.multi_reduction <add>, %96, %cst_33 [1] : vector<16x32xf32> to vector<16xf32>
    %98 = vector.shape_cast %97 : vector<16xf32> to vector<16x1xf32>
    %cst_34 = arith.constant 3.200000e+01 : f32
    %99 = vector.broadcast %cst_34 : f32 to vector<16x1xf32>
    %100 = arith.divf %98, %99 : vector<16x1xf32>
    %101 = vector.broadcast %100 : vector<16x1xf32> to vector<16x32xf32>
    %102 = arith.subf %96, %101 : vector<16x32xf32>
    %c0_35 = arith.constant 0 : index
    %c0_36 = arith.constant 0 : index
    %103 = vector.load %arg10[%c0_35, %c0_36] : memref<1x32xf32, #tpu.memory_space<vmem>>, vector<1x32xf32>
    %104 = arith.mulf %102, %102 : vector<16x32xf32>
    %cst_37 = arith.constant dense<0.000000e+00> : vector<16xf32>
    %105 = vector.multi_reduction <add>, %104, %cst_37 [1] : vector<16x32xf32> to vector<16xf32>
    %106 = vector.shape_cast %105 : vector<16xf32> to vector<16x1xf32>
    %cst_38 = arith.constant 3.200000e+01 : f32
    %107 = vector.broadcast %cst_38 : f32 to vector<16x1xf32>
    %108 = arith.divf %106, %107 : vector<16x1xf32>
    %cst_39 = arith.constant 9.99999974E-6 : f32
    %109 = vector.broadcast %cst_39 : f32 to vector<16x1xf32>
    %110 = arith.addf %108, %109 : vector<16x1xf32>
    %111 = math.rsqrt %110 : vector<16x1xf32>
    %112 = vector.broadcast %111 : vector<16x1xf32> to vector<16x32xf32>
    %113 = arith.mulf %102, %112 : vector<16x32xf32>
    %114 = vector.broadcast %103 : vector<1x32xf32> to vector<16x32xf32>
    %115 = arith.mulf %114, %113 : vector<16x32xf32>
    %c0_40 = arith.constant 0 : index
    %c0_41 = arith.constant 0 : index
    %116 = vector.load %arg11[%c0_40, %c0_41] : memref<1x32xf32, #tpu.memory_space<vmem>>, vector<1x32xf32>
    %117 = vector.broadcast %116 : vector<1x32xf32> to vector<16x32xf32>
    %118 = arith.addf %115, %117 : vector<16x32xf32>
    %c0_42 = arith.constant 0 : index
    %c0_43 = arith.constant 0 : index
    %119 = vector.load %arg12[%c0_42, %c0_43] : memref<32x128xf32, #tpu.memory_space<vmem>>, vector<32x128xf32>
    %cst_44 = arith.constant dense<0.000000e+00> : vector<16x128xf32>
    %120 = tpu.matmul %118, %119, %cst_44 {dimension_numbers = #tpu.dot_dimension_numbers<[1], [0], [0], [1], [0, 0, 1, 1], [], []>} : vector<16x32xf32>, vector<32x128xf32>, vector<16x128xf32> -> vector<16x128xf32>
    %c0_45 = arith.constant 0 : index
    %c0_46 = arith.constant 0 : index
    %121 = vector.load %arg13[%c0_45, %c0_46] : memref<1x128xf32, #tpu.memory_space<vmem>>, vector<1x128xf32>
    %122 = vector.broadcast %121 : vector<1x128xf32> to vector<16x128xf32>
    %123 = arith.addf %120, %122 : vector<16x128xf32>
    %cst_47 = arith.constant 0.000000e+00 : f32
    %124 = vector.broadcast %cst_47 : f32 to vector<16x128xf32>
    %125 = arith.maximumf %123, %124 : vector<16x128xf32>
    %c0_48 = arith.constant 0 : index
    %c0_49 = arith.constant 0 : index
    %126 = vector.load %arg14[%c0_48, %c0_49] : memref<128x32xf32, #tpu.memory_space<vmem>>, vector<128x32xf32>
    %cst_50 = arith.constant dense<0.000000e+00> : vector<16x32xf32>
    %127 = tpu.matmul %125, %126, %cst_50 {dimension_numbers = #tpu.dot_dimension_numbers<[1], [0], [0], [1], [0, 0, 1, 1], [], []>} : vector<16x128xf32>, vector<128x32xf32>, vector<16x32xf32> -> vector<16x32xf32>
    %c0_51 = arith.constant 0 : index
    %c0_52 = arith.constant 0 : index
    %128 = vector.load %arg15[%c0_51, %c0_52] : memref<1x32xf32, #tpu.memory_space<vmem>>, vector<1x32xf32>
    %129 = vector.broadcast %128 : vector<1x32xf32> to vector<16x32xf32>
    %130 = arith.addf %127, %129 : vector<16x32xf32>
    %131 = arith.addf %118, %130 : vector<16x32xf32>
    %cst_53 = arith.constant dense<0.000000e+00> : vector<16xf32>
    %132 = vector.multi_reduction <add>, %131, %cst_53 [1] : vector<16x32xf32> to vector<16xf32>
    %133 = vector.shape_cast %132 : vector<16xf32> to vector<16x1xf32>
    %cst_54 = arith.constant 3.200000e+01 : f32
    %134 = vector.broadcast %cst_54 : f32 to vector<16x1xf32>
    %135 = arith.divf %133, %134 : vector<16x1xf32>
    %136 = vector.broadcast %135 : vector<16x1xf32> to vector<16x32xf32>
    %137 = arith.subf %131, %136 : vector<16x32xf32>
    %c0_55 = arith.constant 0 : index
    %c0_56 = arith.constant 0 : index
    %138 = vector.load %arg16[%c0_55, %c0_56] : memref<1x32xf32, #tpu.memory_space<vmem>>, vector<1x32xf32>
    %139 = arith.mulf %137, %137 : vector<16x32xf32>
    %cst_57 = arith.constant dense<0.000000e+00> : vector<16xf32>
    %140 = vector.multi_reduction <add>, %139, %cst_57 [1] : vector<16x32xf32> to vector<16xf32>
    %141 = vector.shape_cast %140 : vector<16xf32> to vector<16x1xf32>
    %cst_58 = arith.constant 3.200000e+01 : f32
    %142 = vector.broadcast %cst_58 : f32 to vector<16x1xf32>
    %143 = arith.divf %141, %142 : vector<16x1xf32>
    %cst_59 = arith.constant 9.99999974E-6 : f32
    %144 = vector.broadcast %cst_59 : f32 to vector<16x1xf32>
    %145 = arith.addf %143, %144 : vector<16x1xf32>
    %146 = math.rsqrt %145 : vector<16x1xf32>
    %147 = vector.broadcast %146 : vector<16x1xf32> to vector<16x32xf32>
    %148 = arith.mulf %137, %147 : vector<16x32xf32>
    %149 = vector.broadcast %138 : vector<1x32xf32> to vector<16x32xf32>
    %150 = arith.mulf %149, %148 : vector<16x32xf32>
    %c0_60 = arith.constant 0 : index
    %c0_61 = arith.constant 0 : index
    %151 = vector.load %arg17[%c0_60, %c0_61] : memref<1x32xf32, #tpu.memory_space<vmem>>, vector<1x32xf32>
    %152 = vector.broadcast %151 : vector<1x32xf32> to vector<16x32xf32>
    %153 = arith.addf %150, %152 : vector<16x32xf32>
    %c0_62 = arith.constant 0 : index
    %c0_63 = arith.constant 0 : index
    %154 = vector.load %arg18[%c0_62, %c0_63] : memref<16x32xf32, #tpu.memory_space<vmem>>, vector<16x32xf32>
    tpu.vector_store %arg18[%c0_62, %c0_63], %153 {strides = array<i32>} : memref<16x32xf32, #tpu.memory_space<vmem>>, vector<16x32xf32>,
    return
  }
  func.func @transform_0(%arg0: i32) -> (i32, i32) {
    %c0_i32 = arith.constant 0 : i32
    %c0_i32_0 = arith.constant 0 : i32
    return %arg0, %c0_i32 : i32, i32
  }
  func.func @transform_1(%arg0: i32) -> (i32, i32) {
    %c0_i32 = arith.constant 0 : i32
    %c0_i32_0 = arith.constant 0 : i32
    %c0_i32_1 = arith.constant 0 : i32
    return %c0_i32, %c0_i32_0 : i32, i32
  }
  func.func @transform_2(%arg0: i32) -> (i32, i32, i32) {
    %c0_i32 = arith.constant 0 : i32
    %c0_i32_0 = arith.constant 0 : i32
    %c0_i32_1 = arith.constant 0 : i32
    %c0_i32_2 = arith.constant 0 : i32
    return %c0_i32, %c0_i32_0, %c0_i32_1 : i32, i32, i32
  }
  func.func @transform_3(%arg0: i32) -> (i32, i32) {
    %c0_i32 = arith.constant 0 : i32
    %c0_i32_0 = arith.constant 0 : i32
    %c0_i32_1 = arith.constant 0 : i32
    return %c0_i32, %c0_i32_0 : i32, i32
  }
  func.func @transform_4(%arg0: i32) -> (i32, i32) {
    %c0_i32 = arith.constant 0 : i32
    %c0_i32_0 = arith.constant 0 : i32
    %c0_i32_1 = arith.constant 0 : i32
    return %c0_i32, %c0_i32_0 : i32, i32
  }
  func.func @transform_5(%arg0: i32) -> (i32, i32) {
    %c0_i32 = arith.constant 0 : i32
    %c0_i32_0 = arith.constant 0 : i32
    %c0_i32_1 = arith.constant 0 : i32
    return %c0_i32, %c0_i32_0 : i32, i32
  }
  func.func @transform_6(%arg0: i32) -> (i32, i32) {
    %c0_i32 = arith.constant 0 : i32
    %c0_i32_0 = arith.constant 0 : i32
    %c0_i32_1 = arith.constant 0 : i32
    return %c0_i32, %c0_i32_0 : i32, i32
  }
  func.func @transform_7(%arg0: i32) -> (i32, i32) {
    %c0_i32 = arith.constant 0 : i32
    %c0_i32_0 = arith.constant 0 : i32
    %c0_i32_1 = arith.constant 0 : i32
    return %c0_i32, %c0_i32_0 : i32, i32
  }
  func.func @transform_8(%arg0: i32) -> (i32, i32) {
    %c0_i32 = arith.constant 0 : i32
    %c0_i32_0 = arith.constant 0 : i32
    %c0_i32_1 = arith.constant 0 : i32
    return %c0_i32, %c0_i32_0 : i32, i32
  }
  func.func @transform_9(%arg0: i32) -> (i32, i32) {
    %c0_i32 = arith.constant 0 : i32
    %c0_i32_0 = arith.constant 0 : i32
    %c0_i32_1 = arith.constant 0 : i32
    return %c0_i32, %c0_i32_0 : i32, i32
  }
  func.func @transform_10(%arg0: i32) -> (i32, i32) {
    %c0_i32 = arith.constant 0 : i32
    %c0_i32_0 = arith.constant 0 : i32
    %c0_i32_1 = arith.constant 0 : i32
    return %c0_i32, %c0_i32_0 : i32, i32
  }
  func.func @transform_11(%arg0: i32) -> (i32, i32) {
    %c0_i32 = arith.constant 0 : i32
    %c0_i32_0 = arith.constant 0 : i32
    %c0_i32_1 = arith.constant 0 : i32
    return %c0_i32, %c0_i32_0 : i32, i32
  }
  func.func @transform_12(%arg0: i32) -> (i32, i32) {
    %c0_i32 = arith.constant 0 : i32
    %c0_i32_0 = arith.constant 0 : i32
    %c0_i32_1 = arith.constant 0 : i32
    return %c0_i32, %c0_i32_0 : i32, i32
  }
  func.func @transform_13(%arg0: i32) -> (i32, i32) {
    %c0_i32 = arith.constant 0 : i32
    %c0_i32_0 = arith.constant 0 : i32
    %c0_i32_1 = arith.constant 0 : i32
    return %c0_i32, %c0_i32_0 : i32, i32
  }
  func.func @transform_14(%arg0: i32) -> (i32, i32) {
    %c0_i32 = arith.constant 0 : i32
    %c0_i32_0 = arith.constant 0 : i32
    %c0_i32_1 = arith.constant 0 : i32
    return %c0_i32, %c0_i32_0 : i32, i32
  }
  func.func @transform_15(%arg0: i32) -> (i32, i32) {
    %c0_i32 = arith.constant 0 : i32
    %c0_i32_0 = arith.constant 0 : i32
    %c0_i32_1 = arith.constant 0 : i32
    return %c0_i32, %c0_i32_0 : i32, i32
  }
  func.func @transform_16(%arg0: i32) -> (i32, i32) {
    %c0_i32 = arith.constant 0 : i32
    %c0_i32_0 = arith.constant 0 : i32
    %c0_i32_1 = arith.constant 0 : i32
    return %c0_i32, %c0_i32_0 : i32, i32
  }
  func.func @transform_17(%arg0: i32) -> (i32, i32) {
    %c0_i32 = arith.constant 0 : i32
    %c0_i32_0 = arith.constant 0 : i32
    return %arg0, %c0_i32 : i32, i32
  }
}

</mosaic_0001>

<llo_original>
// kernel: tpu_custom_call.1
$region0: #{tpu_custom_call.1}
  #allocation0 [shape = 'u32[]', space=smem, size = 0x4, offset = 0x4, fixed_abs, tag = 'smem constant byte address 0x4 - core index']
  #allocation1 [shape = 'u32[144,128]{1,0:T(1,128)}', space=vmem, size = 0x12000, scoped, tag = 'internal scratch']
  %s0 = inlined_call_operand.vmem [shape: f32[16,32], index: 0, kind: input, shape index: {}]
  %s1 = inlined_call_operand.vmem [shape: f32[16,16], index: 1, kind: input, shape index: {}]
  %s2 = inlined_call_operand.vmem [shape: f32[1,16,16], index: 2, kind: input, shape index: {}]
  %s3 = inlined_call_operand.vmem [shape: f32[32,128], index: 3, kind: input, shape index: {}]
  %s4 = inlined_call_operand.vmem [shape: f32[1,128], index: 4, kind: input, shape index: {}]
  %s5 = inlined_call_operand.vmem [shape: f32[64,256], index: 5, kind: input, shape index: {}]
  %s6 = inlined_call_operand.vmem [shape: f32[1,256], index: 6, kind: input, shape index: {}]
  %s7 = inlined_call_operand.vmem [shape: f32[128,32], index: 7, kind: input, shape index: {}]
  %s8 = inlined_call_operand.vmem [shape: f32[1,32], index: 8, kind: input, shape index: {}]
  %s9 = inlined_call_operand.vmem [shape: f32[1,32], index: 9, kind: input, shape index: {}]
  %s10 = inlined_call_operand.vmem [shape: f32[1,32], index: 10, kind: input, shape index: {}]
  %s11 = inlined_call_operand.vmem [shape: f32[32,128], index: 11, kind: input, shape index: {}]
  %s12 = inlined_call_operand.vmem [shape: f32[1,128], index: 12, kind: input, shape index: {}]
  %s13 = inlined_call_operand.vmem [shape: f32[128,32], index: 13, kind: input, shape index: {}]
  %s14 = inlined_call_operand.vmem [shape: f32[1,32], index: 14, kind: input, shape index: {}]
  %s15 = inlined_call_operand.vmem [shape: f32[1,32], index: 15, kind: input, shape index: {}]
  %s16 = inlined_call_operand.vmem [shape: f32[1,32], index: 16, kind: input, shape index: {}]
  %s17 = inlined_call_operand.hbm [shape: f32[16,32], index: 17, kind: output, shape index: {}]
  %s18 = sld [smem:[#allocation0]]
  $region78: #{tpu_custom_call.1} parent=0
    _
  %s20 = ssub.s32 1, %s18
  %s21 = scalar_select 0, %s20, %s18
  $region1: #{tpu_custom_call.1} parent=0
    #allocation2 [shape = 'u8[8192]{0}', space=vmem, size = 0x2000, scoped, tag = 'output window, operand 0, single buffered']
    #allocation3 [shape = 's32[1]{0}', space=sflag, size = 0x4, scoped, tag = 'scoped memory for tpu_custom_call.1']
    %22 = vsyncpa [#allocation3], 0
    // Predicated region
    $region2: #{tpu_custom_call.1} parent=1 // pred_check
      _
    $region3: #{tpu_custom_call.1} parent=1 // pred_check_branch
      %24 = sbr.rel (0) target = $region5
    $region4: #{tpu_custom_call.1} parent=1 // pred_region
      _
    $region5: #{tpu_custom_call.1} parent=1 // pred_fallthru
      _
    // Predicated region
    $region6: #{tpu_custom_call.1} parent=1 // pred_check
      _
    $region7: #{tpu_custom_call.1} parent=1 // pred_check_branch
      %26 = sbr.rel (0) target = $region9
    $region8: #{tpu_custom_call.1} parent=1 // pred_region
      _
    $region9: #{tpu_custom_call.1} parent=1 // pred_fallthru
      _
    // Predicated region
    $region10: #{tpu_custom_call.1} parent=1 // pred_check
      _
    $region11: #{tpu_custom_call.1} parent=1 // pred_check_branch
      %28 = sbr.rel (0) target = $region13
    $region12: #{tpu_custom_call.1} parent=1 // pred_region
      _
    $region13: #{tpu_custom_call.1} parent=1 // pred_fallthru
      _
    // Predicated region
    $region14: #{tpu_custom_call.1} parent=1 // pred_check
      _
    $region15: #{tpu_custom_call.1} parent=1 // pred_check_branch
      %30 = sbr.rel (0) target = $region17
    $region16: #{tpu_custom_call.1} parent=1 // pred_region
      _
    $region17: #{tpu_custom_call.1} parent=1 // pred_fallthru
      _
    // Predicated region
    $region18: #{tpu_custom_call.1} parent=1 // pred_check
      _
    $region19: #{tpu_custom_call.1} parent=1 // pred_check_branch
      %32 = sbr.rel (0) target = $region21
    $region20: #{tpu_custom_call.1} parent=1 // pred_region
      _
    $region21: #{tpu_custom_call.1} parent=1 // pred_fallthru
      _
    // Predicated region
    $region22: #{tpu_custom_call.1} parent=1 // pred_check
      _
    $region23: #{tpu_custom_call.1} parent=1 // pred_check_branch
      %34 = sbr.rel (0) target = $region25
    $region24: #{tpu_custom_call.1} parent=1 // pred_region
      _
    $region25: #{tpu_custom_call.1} parent=1 // pred_fallthru
      _
    // Predicated region
    $region26: #{tpu_custom_call.1} parent=1 // pred_check
      _
    $region27: #{tpu_custom_call.1} parent=1 // pred_check_branch
      %36 = sbr.rel (0) target = $region29
    $region28: #{tpu_custom_call.1} parent=1 // pred_region
      _
    $region29: #{tpu_custom_call.1} parent=1 // pred_fallthru
      _
    // Predicated region
    $region30: #{tpu_custom_call.1} parent=1 // pred_check
      _
    $region31: #{tpu_custom_call.1} parent=1 // pred_check_branch
      %38 = sbr.rel (0) target = $region33
    $region32: #{tpu_custom_call.1} parent=1 // pred_region
      _
    $region33: #{tpu_custom_call.1} parent=1 // pred_fallthru
      _
    // Predicated region
    $region34: #{tpu_custom_call.1} parent=1 // pred_check
      _
    $region35: #{tpu_custom_call.1} parent=1 // pred_check_branch
      %40 = sbr.rel (0) target = $region37
    $region36: #{tpu_custom_call.1} parent=1 // pred_region
      _
    $region37: #{tpu_custom_call.1} parent=1 // pred_fallthru
      _
    // Predicated region
    $region38: #{tpu_custom_call.1} parent=1 // pred_check
      _
    $region39: #{tpu_custom_call.1} parent=1 // pred_check_branch
      %42 = sbr.rel (0) target = $region41
    $region40: #{tpu_custom_call.1} parent=1 // pred_region
      _
    $region41: #{tpu_custom_call.1} parent=1 // pred_fallthru
      _
    // Predicated region
    $region42: #{tpu_custom_call.1} parent=1 // pred_check
      _
    $region43: #{tpu_custom_call.1} parent=1 // pred_check_branch
      %44 = sbr.rel (0) target = $region45
    $region44: #{tpu_custom_call.1} parent=1 // pred_region
      _
    $region45: #{tpu_custom_call.1} parent=1 // pred_fallthru
      _
    // Predicated region
    $region46: #{tpu_custom_call.1} parent=1 // pred_check
      _
    $region47: #{tpu_custom_call.1} parent=1 // pred_check_branch
      %46 = sbr.rel (0) target = $region49
    $region48: #{tpu_custom_call.1} parent=1 // pred_region
      _
    $region49: #{tpu_custom_call.1} parent=1 // pred_fallthru
      _
    // Predicated region
    $region50: #{tpu_custom_call.1} parent=1 // pred_check
      _
    $region51: #{tpu_custom_call.1} parent=1 // pred_check_branch
      %48 = sbr.rel (0) target = $region53
    $region52: #{tpu_custom_call.1} parent=1 // pred_region
      _
    $region53: #{tpu_custom_call.1} parent=1 // pred_fallthru
      _
    // Predicated region
    $region54: #{tpu_custom_call.1} parent=1 // pred_check
      _
    $region55: #{tpu_custom_call.1} parent=1 // pred_check_branch
      %50 = sbr.rel (0) target = $region57
    $region56: #{tpu_custom_call.1} parent=1 // pred_region
      _
    $region57: #{tpu_custom_call.1} parent=1 // pred_fallthru
      _
    // Predicated region
    $region58: #{tpu_custom_call.1} parent=1 // pred_check
      _
    $region59: #{tpu_custom_call.1} parent=1 // pred_check_branch
      %52 = sbr.rel (0) target = $region61
    $region60: #{tpu_custom_call.1} parent=1 // pred_region
      _
    $region61: #{tpu_custom_call.1} parent=1 // pred_fallthru
      _
    // Predicated region
    $region62: #{tpu_custom_call.1} parent=1 // pred_check
      _
    $region63: #{tpu_custom_call.1} parent=1 // pred_check_branch
      %54 = sbr.rel (0) target = $region65
    $region64: #{tpu_custom_call.1} parent=1 // pred_region
      _
    $region65: #{tpu_custom_call.1} parent=1 // pred_fallthru
      _
    // Predicated region
    $region66: #{tpu_custom_call.1} parent=1 // pred_check
      _
    $region67: #{tpu_custom_call.1} parent=1 // pred_check_branch
      %56 = sbr.rel (0) target = $region69
    $region68: #{tpu_custom_call.1} parent=1 // pred_region
      _
    $region69: #{tpu_custom_call.1} parent=1 // pred_fallthru
      _
    %v57 = vld [vmem:[%s0] sm:$0xff]
    %v58 = vld [vmem:[%s0 + $0x8] sm:$0xff]
    %v59 = vld [vmem:[%s3] sm:$0xff]
    %v60 = vld [vmem:[%s3 + $0x8] sm:$0xff]
    %v61 = vld [vmem:[%s3 + $0x10] sm:$0xff]
    %v62 = vld [vmem:[%s3 + $0x18] sm:$0xff]
    %v63 = vld [vmem:[%s4] sm:$0x1]
    %v65 = vlaneseq
    %v66 = vshrl.u32 %v65, 7
    %v67 = vsub.s32 0, %v66
    %v68 = vrot.slane %v63, %v67
    %vm70 = vcmask 261120
    %v72 = vsel %vm70, %v57, 0
    %v75 = vsel %vm70, %v58, 0
    %77 = vmatprep.subr.mxu0 0.0
    %78 = vmatpush1.msra.mxu0 0.0
    %79 = vmatprep.subr.mxu0 0.0
    %80 = vmatpush1.msra.mxu0 0.0
    %81 = vmatprep.subr.mxu0 0.0
    %82 = vmatpush1.msra.mxu0 0.0
    %83 = vmatprep.subr.mxu0 0.0
    %84 = vmatpush1.msra.mxu0 0.0
    %85 = vmatprep.subr.mxu0 0.0
    %86 = vmatpush1.msra.mxu0 0.0
    %87 = vmatprep.subr.mxu0 0.0
    %88 = vmatpush1.msra.mxu0 0.0
    %89 = vmatprep.subr.mxu0 0.0
    %90 = vmatpush1.msra.mxu0 0.0
    %91 = vmatprep.subr.mxu0 0.0
    %92 = vmatpush1.msra.mxu0 0.0
    %93 = vmatprep.subr.mxu0 0.0
    %94 = vmatpush1.msra.mxu0 0.0
    %95 = vmatprep.subr.mxu0 0.0
    %96 = vmatpush1.msra.mxu0 0.0
    %97 = vmatprep.subr.mxu0 0.0
    %98 = vmatpush1.msra.mxu0 0.0
    %99 = vmatprep.subr.mxu0 0.0
    %100 = vmatpush1.msra.mxu0 0.0
    %101 = vmatprep.subr.mxu0 0.0
    %102 = vmatpush1.msra.mxu0 %v62
    %103 = vmatprep.subr.mxu0 0.0
    %104 = vmatpush1.msra.mxu0 %v61
    %105 = vmatprep.subr.mxu0 0.0
    %106 = vmatpush1.msra.mxu0 %v60
    %107 = vmatprep.subr.mxu0 0.0
    %108 = vmatpush1.msra.mxu0 %v59
    %109 = vmatprep.subr.mxu0 0.0
    %110 = vmatpush2.msra.mxu0 0.0
    %111 = vmatprep.subr.mxu0 0.0
    %112 = vmatpush2.msra.mxu0 0.0
    %113 = vmatprep.subr.mxu0 0.0
    %114 = vmatpush2.msra.mxu0 0.0
    %115 = vmatprep.subr.mxu0 0.0
    %116 = vmatpush2.msra.mxu0 0.0
    %117 = vmatprep.subr.mxu0 0.0
    %118 = vmatpush2.msra.mxu0 0.0
    %119 = vmatprep.subr.mxu0 0.0
    %120 = vmatpush2.msra.mxu0 0.0
    %121 = vmatprep.subr.mxu0 0.0
    %122 = vmatpush2.msra.mxu0 0.0
    %123 = vmatprep.subr.mxu0 0.0
    %124 = vmatpush2.msra.mxu0 0.0
    %125 = vmatprep.subr.mxu0 0.0
    %126 = vmatpush2.msra.mxu0 0.0
    %127 = vmatprep.subr.mxu0 0.0
    %128 = vmatpush2.msra.mxu0 0.0
    %129 = vmatprep.subr.mxu0 0.0
    %130 = vmatpush2.msra.mxu0 0.0
    %131 = vmatprep.subr.mxu0 0.0
    %132 = vmatpush2.msra.mxu0 0.0
    %133 = vmatprep.subr.mxu0 0.0
    %134 = vmatpush2.msra.mxu0 0.0
    %135 = vmatprep.subr.mxu0 0.0
    %136 = vmatpush2.msra.mxu0 0.0
    %137 = vmatprep.subr.mxu0 0.0
    %138 = vmatpush2.msra.mxu0 0.0
    %139 = vmatprep.subr.mxu0 0.0
    %140 = vmatpush2.msra.mxu0 0.0
    %141 = vmatprep.mubr.f32.mxu0 0.0
    %142 = vmatmul.mubr.f32.gmra.mxu0 %v72
    %v143 = vpop.f32.mrf.mxu0
    %v144 = vadd.f32 %v68, %v143
    %v145 = vpop.f32.mrf.mxu0
    %146 = vmatprep.mubr.f32.mxu0 0.0
    %147 = vmatmul.mubr.f32.gmra.mxu0 %v75
    %v148 = vpop.f32.mrf.mxu0
    %v149 = vadd.f32 %v68, %v148
    %v150 = vpop.f32.mrf.mxu0
    %151 = vdwg.mxu0
    %v152 = vld [vmem:[%s5] sm:$0xff]
    %v153 = vld [vmem:[%s5 + $0x8] sm:$0xff]
    %v154 = vld [vmem:[%s5 + $0x10] sm:$0xff]
    %v155 = vld [vmem:[%s5 + $0x18] sm:$0xff]
    %v156 = vld [vmem:[%s5 + $0x20] sm:$0xff]
    %v157 = vld [vmem:[%s5 + $0x28] sm:$0xff]
    %v158 = vld [vmem:[%s5 + $0x30] sm:$0xff]
    %v159 = vld [vmem:[%s5 + $0x38] sm:$0xff]
    %v160 = vld [vmem:[%s5 + $0x40] sm:$0xff]
    %v161 = vld [vmem:[%s5 + $0x48] sm:$0xff]
    %v162 = vld [vmem:[%s5 + $0x50] sm:$0xff]
    %v163 = vld [vmem:[%s5 + $0x58] sm:$0xff]
    %v164 = vld [vmem:[%s5 + $0x60] sm:$0xff]
    %v165 = vld [vmem:[%s5 + $0x68] sm:$0xff]
    %v166 = vld [vmem:[%s5 + $0x70] sm:$0xff]
    %v167 = vld [vmem:[%s5 + $0x78] sm:$0xff]
    %v168 = vld [vmem:[%s6] sm:$0x3]
    %v170 = vlaneseq
    %v171 = vshrl.u32 %v170, 7
    %v172 = vsub.s32 0, %v171
    %v173 = vrot.slane %v168, %v172
    %v174 = vlaneseq
    %v175 = vshrl.u32 %v174, 7
    %v176 = vsub.s32 1, %v175
    %v177 = vrot.slane %v168, %v176
    %180 = vmatprep.subr.mxu0 0.0
    %181 = vmatpush1.msra.mxu0 0.0
    %182 = vmatprep.subr.mxu0 0.0
    %183 = vmatpush1.msra.mxu0 0.0
    %184 = vmatprep.subr.mxu0 0.0
    %185 = vmatpush1.msra.mxu0 0.0
    %186 = vmatprep.subr.mxu0 0.0
    %187 = vmatpush1.msra.mxu0 0.0
    %188 = vmatprep.subr.mxu0 0.0
    %189 = vmatpush1.msra.mxu0 0.0
    %190 = vmatprep.subr.mxu0 0.0
    %191 = vmatpush1.msra.mxu0 0.0
    %192 = vmatprep.subr.mxu0 0.0
    %193 = vmatpush1.msra.mxu0 0.0
    %194 = vmatprep.subr.mxu0 0.0
    %195 = vmatpush1.msra.mxu0 0.0
    %196 = vmatprep.subr.mxu0 0.0
    %197 = vmatpush1.msra.mxu0 0.0
    %198 = vmatprep.subr.mxu0 0.0
    %199 = vmatpush1.msra.mxu0 0.0
    %200 = vmatprep.subr.mxu0 0.0
    %201 = vmatpush1.msra.mxu0 0.0
    %202 = vmatprep.subr.mxu0 0.0
    %203 = vmatpush1.msra.mxu0 0.0
    %204 = vmatprep.subr.mxu0 %v167
    %205 = vmatpush1.msra.mxu0 %v166
    %206 = vmatprep.subr.mxu0 %v165
    %207 = vmatpush1.msra.mxu0 %v164
    %208 = vmatprep.subr.mxu0 %v163
    %209 = vmatpush1.msra.mxu0 %v162
    %210 = vmatprep.subr.mxu0 %v161
    %211 = vmatpush1.msra.mxu0 %v160
    %212 = vmatprep.subr.mxu0 0.0
    %213 = vmatpush2.msra.mxu0 0.0
    %214 = vmatprep.subr.mxu0 0.0
    %215 = vmatpush2.msra.mxu0 0.0
    %216 = vmatprep.subr.mxu0 0.0
    %217 = vmatpush2.msra.mxu0 0.0
    %218 = vmatprep.subr.mxu0 0.0
    %219 = vmatpush2.msra.mxu0 0.0
    %220 = vmatprep.subr.mxu0 0.0
    %221 = vmatpush2.msra.mxu0 0.0
    %222 = vmatprep.subr.mxu0 0.0
    %223 = vmatpush2.msra.mxu0 0.0
    %224 = vmatprep.subr.mxu0 0.0
    %225 = vmatpush2.msra.mxu0 0.0
    %226 = vmatprep.subr.mxu0 0.0
    %227 = vmatpush2.msra.mxu0 0.0
    %228 = vmatprep.subr.mxu0 0.0
    %229 = vmatpush2.msra.mxu0 0.0
    %230 = vmatprep.subr.mxu0 0.0
    %231 = vmatpush2.msra.mxu0 0.0
    %232 = vmatprep.subr.mxu0 0.0
    %233 = vmatpush2.msra.mxu0 0.0
    %234 = vmatprep.subr.mxu0 0.0
    %235 = vmatpush2.msra.mxu0 0.0
    %236 = vmatprep.subr.mxu0 0.0
    %237 = vmatpush2.msra.mxu0 0.0
    %238 = vmatprep.subr.mxu0 0.0
    %239 = vmatpush2.msra.mxu0 0.0
    %240 = vmatprep.subr.mxu0 0.0
    %241 = vmatpush2.msra.mxu0 0.0
    %242 = vmatprep.subr.mxu0 0.0
    %243 = vmatpush2.msra.mxu0 0.0
    %244 = vmatprep.mubr.f32.mxu0 0.0
    %245 = vmatmul.mubr.f32.gmra.mxu0 %v72
    %v246 = vpop.f32.mrf.mxu0
    %v247 = vadd.f32 %v173, %v246
    %v248 = vpop.f32.mrf.mxu0
    %v249 = vadd.f32 %v177, %v248
    %250 = vmatprep.mubr.f32.mxu0 0.0
    %251 = vmatmul.mubr.f32.gmra.mxu0 %v75
    %v252 = vpop.f32.mrf.mxu0
    %v253 = vadd.f32 %v173, %v252
    %v254 = vpop.f32.mrf.mxu0
    %v255 = vadd.f32 %v177, %v254
    %256 = vdwg.mxu0
    %v257 = vld [vmem:[%s2] sm:$0xff]
    %v258 = vld [vmem:[%s2 + $0x8] sm:$0xff]
    %vm259 = vcmask 130048
    %v261 = vsel %vm259, %v257, 0
    %v264 = vsel %vm259, %v258, 0
    %266 = vmatprep.subr.mxu0 0.0
    %267 = vmatpush1.msra.mxu0 0.0
    %268 = vmatprep.subr.mxu0 0.0
    %269 = vmatpush1.msra.mxu0 0.0
    %270 = vmatprep.subr.mxu0 0.0
    %271 = vmatpush1.msra.mxu0 0.0
    %272 = vmatprep.subr.mxu0 0.0
    %273 = vmatpush1.msra.mxu0 0.0
    %274 = vmatprep.subr.mxu0 0.0
    %275 = vmatpush1.msra.mxu0 0.0
    %276 = vmatprep.subr.mxu0 0.0
    %277 = vmatpush1.msra.mxu0 0.0
    %278 = vmatprep.subr.mxu0 0.0
    %279 = vmatpush1.msra.mxu0 0.0
    %280 = vmatprep.subr.mxu0 0.0
    %281 = vmatpush1.msra.mxu0 0.0
    %282 = vmatprep.subr.mxu0 0.0
    %283 = vmatpush1.msra.mxu0 0.0
    %284 = vmatprep.subr.mxu0 0.0
    %285 = vmatpush1.msra.mxu0 0.0
    %286 = vmatprep.subr.mxu0 0.0
    %287 = vmatpush1.msra.mxu0 0.0
    %288 = vmatprep.subr.mxu0 0.0
    %289 = vmatpush1.msra.mxu0 0.0
    %290 = vmatprep.subr.mxu0 0.0
    %291 = vmatpush1.msra.mxu0 0.0
    %292 = vmatprep.subr.mxu0 0.0
    %293 = vmatpush1.msra.mxu0 0.0
    %294 = vmatprep.subr.mxu0 0.0
    %295 = vmatpush1.msra.mxu0 %v58
    %296 = vmatprep.subr.mxu0 0.0
    %297 = vmatpush1.msra.mxu0 %v57
    %298 = vmatprep.subr.mxu0 0.0
    %299 = vmatpush2.msra.mxu0 0.0
    %300 = vmatprep.subr.mxu0 0.0
    %301 = vmatpush2.msra.mxu0 0.0
    %302 = vmatprep.subr.mxu0 0.0
    %303 = vmatpush2.msra.mxu0 0.0
    %304 = vmatprep.subr.mxu0 0.0
    %305 = vmatpush2.msra.mxu0 0.0
    %306 = vmatprep.subr.mxu0 0.0
    %307 = vmatpush2.msra.mxu0 0.0
    %308 = vmatprep.subr.mxu0 0.0
    %309 = vmatpush2.msra.mxu0 0.0
    %310 = vmatprep.subr.mxu0 0.0
    %311 = vmatpush2.msra.mxu0 0.0
    %312 = vmatprep.subr.mxu0 0.0
    %313 = vmatpush2.msra.mxu0 0.0
    %314 = vmatprep.subr.mxu0 0.0
    %315 = vmatpush2.msra.mxu0 0.0
    %316 = vmatprep.subr.mxu0 0.0
    %317 = vmatpush2.msra.mxu0 0.0
    %318 = vmatprep.subr.mxu0 0.0
    %319 = vmatpush2.msra.mxu0 0.0
    %320 = vmatprep.subr.mxu0 0.0
    %321 = vmatpush2.msra.mxu0 0.0
    %322 = vmatprep.subr.mxu0 0.0
    %323 = vmatpush2.msra.mxu0 0.0
    %324 = vmatprep.subr.mxu0 0.0
    %325 = vmatpush2.msra.mxu0 0.0
    %326 = vmatprep.subr.mxu0 0.0
    %327 = vmatpush2.msra.mxu0 0.0
    %328 = vmatprep.subr.mxu0 0.0
    %329 = vmatpush2.msra.mxu0 0.0
    %330 = vmatprep.mubr.f32.mxu0 0.0
    %331 = vmatmul.mubr.f32.gmra.mxu0 %v261
    %v332 = vpop.f32.mrf.mxu0
    %v333 = vadd.f32 0.0, %v332
    %v334 = vpop.f32.mrf.mxu0
    %335 = vmatprep.mubr.f32.mxu0 0.0
    %336 = vmatmul.mubr.f32.gmra.mxu0 %v264
    %v337 = vpop.f32.mrf.mxu0
    %v338 = vadd.f32 0.0, %v337
    %v339 = vpop.f32.mrf.mxu0
    %340 = vdwg.mxu0
    %v342 = vsel %vm70, %v333, 0
    %v345 = vsel %vm70, %v338, 0
    %347 = vmatprep.subr.mxu0 0.0
    %348 = vmatpush1.msra.mxu0 0.0
    %349 = vmatprep.subr.mxu0 0.0
    %350 = vmatpush1.msra.mxu0 0.0
    %351 = vmatprep.subr.mxu0 0.0
    %352 = vmatpush1.msra.mxu0 0.0
    %353 = vmatprep.subr.mxu0 0.0
    %354 = vmatpush1.msra.mxu0 0.0
    %355 = vmatprep.subr.mxu0 0.0
    %356 = vmatpush1.msra.mxu0 0.0
    %357 = vmatprep.subr.mxu0 0.0
    %358 = vmatpush1.msra.mxu0 0.0
    %359 = vmatprep.subr.mxu0 0.0
    %360 = vmatpush1.msra.mxu0 0.0
    %361 = vmatprep.subr.mxu0 0.0
    %362 = vmatpush1.msra.mxu0 0.0
    %363 = vmatprep.subr.mxu0 0.0
    %364 = vmatpush1.msra.mxu0 0.0
    %365 = vmatprep.subr.mxu0 0.0
    %366 = vmatpush1.msra.mxu0 0.0
    %367 = vmatprep.subr.mxu0 0.0
    %368 = vmatpush1.msra.mxu0 0.0
    %369 = vmatprep.subr.mxu0 0.0
    %370 = vmatpush1.msra.mxu0 0.0
    %371 = vmatprep.subr.mxu0 %v159
    %372 = vmatpush1.msra.mxu0 %v158
    %373 = vmatprep.subr.mxu0 %v157
    %374 = vmatpush1.msra.mxu0 %v156
    %375 = vmatprep.subr.mxu0 %v155
    %376 = vmatpush1.msra.mxu0 %v154
    %377 = vmatprep.subr.mxu0 %v153
    %378 = vmatpush1.msra.mxu0 %v152
    %379 = vmatprep.subr.mxu0 0.0
    %380 = vmatpush2.msra.mxu0 0.0
    %381 = vmatprep.subr.mxu0 0.0
    %382 = vmatpush2.msra.mxu0 0.0
    %383 = vmatprep.subr.mxu0 0.0
    %384 = vmatpush2.msra.mxu0 0.0
    %385 = vmatprep.subr.mxu0 0.0
    %386 = vmatpush2.msra.mxu0 0.0
    %387 = vmatprep.subr.mxu0 0.0
    %388 = vmatpush2.msra.mxu0 0.0
    %389 = vmatprep.subr.mxu0 0.0
    %390 = vmatpush2.msra.mxu0 0.0
    %391 = vmatprep.subr.mxu0 0.0
    %392 = vmatpush2.msra.mxu0 0.0
    %393 = vmatprep.subr.mxu0 0.0
    %394 = vmatpush2.msra.mxu0 0.0
    %395 = vmatprep.subr.mxu0 0.0
    %396 = vmatpush2.msra.mxu0 0.0
    %397 = vmatprep.subr.mxu0 0.0
    %398 = vmatpush2.msra.mxu0 0.0
    %399 = vmatprep.subr.mxu0 0.0
    %400 = vmatpush2.msra.mxu0 0.0
    %401 = vmatprep.subr.mxu0 0.0
    %402 = vmatpush2.msra.mxu0 0.0
    %403 = vmatprep.subr.mxu0 0.0
    %404 = vmatpush2.msra.mxu0 0.0
    %405 = vmatprep.subr.mxu0 0.0
    %406 = vmatpush2.msra.mxu0 0.0
    %407 = vmatprep.subr.mxu0 0.0
    %408 = vmatpush2.msra.mxu0 0.0
    %409 = vmatprep.subr.mxu0 0.0
    %410 = vmatpush2.msra.mxu0 0.0
    %411 = vmatprep.mubr.f32.mxu0 0.0
    %412 = vmatmul.mubr.f32.gmra.mxu0 %v342
    %v413 = vpop.f32.mrf.mxu0
    %v414 = vadd.f32 0.0, %v413
    %v415 = vpop.f32.mrf.mxu0
    %v416 = vadd.f32 0.0, %v415
    %417 = vmatprep.mubr.f32.mxu0 0.0
    %418 = vmatmul.mubr.f32.gmra.mxu0 %v345
    %v419 = vpop.f32.mrf.mxu0
    %v420 = vadd.f32 0.0, %v419
    %v421 = vpop.f32.mrf.mxu0
    %v422 = vadd.f32 0.0, %v421
    %423 = vdwg.mxu0
    %v424 = vadd.f32 %v247, %v414
    %v425 = vadd.f32 %v249, %v416
    %v426 = vadd.f32 %v253, %v420
    %v427 = vadd.f32 %v255, %v422
    %430 = vrot.lane.b32.xlu0 %v424, 96
    %v431 = vpop.permute.xlu0 %430
    %432 = vrot.lane.b32.xlu0 %v426, 96
    %v433 = vpop.permute.xlu0 %432
    %434 = vrot.lane.b32.xlu0 %v424, 64
    %v435 = vpop.permute.xlu0 %434
    %436 = vrot.lane.b32.xlu0 %v426, 64
    %v437 = vpop.permute.xlu0 %436
    %438 = vrot.lane.b32.xlu0 %v424, 32
    %v439 = vpop.permute.xlu0 %438
    %440 = vrot.lane.b32.xlu0 %v426, 32
    %v441 = vpop.permute.xlu0 %440
    %444 = vrot.lane.b32.xlu0 %v425, 96
    %v445 = vpop.permute.xlu0 %444
    %446 = vrot.lane.b32.xlu0 %v427, 96
    %v447 = vpop.permute.xlu0 %446
    %448 = vrot.lane.b32.xlu0 %v425, 64
    %v449 = vpop.permute.xlu0 %448
    %450 = vrot.lane.b32.xlu0 %v427, 64
    %v451 = vpop.permute.xlu0 %450
    %452 = vrot.lane.b32.xlu0 %v425, 32
    %v453 = vpop.permute.xlu0 %452
    %454 = vrot.lane.b32.xlu0 %v427, 32
    %v455 = vpop.permute.xlu0 %454
    %458 = vrot.lane.b32.xlu0 %v144, 96
    %v459 = vpop.permute.xlu0 %458
    %460 = vrot.lane.b32.xlu0 %v149, 96
    %v461 = vpop.permute.xlu0 %460
    %464 = vrot.lane.b32.xlu0 %v144, 64
    %v465 = vpop.permute.xlu0 %464
    %466 = vrot.lane.b32.xlu0 %v149, 64
    %v467 = vpop.permute.xlu0 %466
    %470 = vrot.lane.b32.xlu0 %v144, 32
    %v471 = vpop.permute.xlu0 %470
    %472 = vrot.lane.b32.xlu0 %v149, 32
    %v473 = vpop.permute.xlu0 %472
    %v476 = vsel %vm70, %v424, 0
    %v478 = vsel %vm70, %v426, 0
    %v480 = vsel %vm70, %v425, 0
    %v482 = vsel %vm70, %v427, 0
    %484 = vmatprep.subr.mxu0 0.0
    %485 = vmatpush1.xpose.msra.mxu0 0.0
    %486 = vmatprep.subr.mxu0 0.0
    %487 = vmatpush1.xpose.msra.mxu0 0.0
    %488 = vmatprep.subr.mxu0 0.0
    %489 = vmatpush1.xpose.msra.mxu0 0.0
    %490 = vmatprep.subr.mxu0 0.0
    %491 = vmatpush1.xpose.msra.mxu0 0.0
    %492 = vmatprep.subr.mxu0 0.0
    %493 = vmatpush1.xpose.msra.mxu0 0.0
    %494 = vmatprep.subr.mxu0 0.0
    %495 = vmatpush1.xpose.msra.mxu0 0.0
    %496 = vmatprep.subr.mxu0 0.0
    %497 = vmatpush1.xpose.msra.mxu0 0.0
    %498 = vmatprep.subr.mxu0 0.0
    %499 = vmatpush1.xpose.msra.mxu0 0.0
    %500 = vmatprep.subr.mxu0 0.0
    %501 = vmatpush1.xpose.msra.mxu0 0.0
    %502 = vmatprep.subr.mxu0 0.0
    %503 = vmatpush1.xpose.msra.mxu0 0.0
    %504 = vmatprep.subr.mxu0 0.0
    %505 = vmatpush1.xpose.msra.mxu0 0.0
    %506 = vmatprep.subr.mxu0 0.0
    %507 = vmatpush1.xpose.msra.mxu0 0.0
    %508 = vmatprep.subr.mxu0 0.0
    %509 = vmatpush1.xpose.msra.mxu0 0.0
    %510 = vmatprep.subr.mxu0 0.0
    %511 = vmatpush1.xpose.msra.mxu0 0.0
    %512 = vmatprep.subr.mxu0 0.0
    %513 = vmatpush1.xpose.msra.mxu0 %v482
    %514 = vmatprep.subr.mxu0 0.0
    %515 = vmatpush1.xpose.msra.mxu0 %v480
    %516 = vmatprep.subr.mxu0 0.0
    %517 = vmatpush2.xpose.msra.mxu0 0.0
    %518 = vmatprep.subr.mxu0 0.0
    %519 = vmatpush2.xpose.msra.mxu0 0.0
    %520 = vmatprep.subr.mxu0 0.0
    %521 = vmatpush2.xpose.msra.mxu0 0.0
    %522 = vmatprep.subr.mxu0 0.0
    %523 = vmatpush2.xpose.msra.mxu0 0.0
    %524 = vmatprep.subr.mxu0 0.0
    %525 = vmatpush2.xpose.msra.mxu0 0.0
    %526 = vmatprep.subr.mxu0 0.0
    %527 = vmatpush2.xpose.msra.mxu0 0.0
    %528 = vmatprep.subr.mxu0 0.0
    %529 = vmatpush2.xpose.msra.mxu0 0.0
    %530 = vmatprep.subr.mxu0 0.0
    %531 = vmatpush2.xpose.msra.mxu0 0.0
    %532 = vmatprep.subr.mxu0 0.0
    %533 = vmatpush2.xpose.msra.mxu0 0.0
    %534 = vmatprep.subr.mxu0 0.0
    %535 = vmatpush2.xpose.msra.mxu0 0.0
    %536 = vmatprep.subr.mxu0 0.0
    %537 = vmatpush2.xpose.msra.mxu0 0.0
    %538 = vmatprep.subr.mxu0 0.0
    %539 = vmatpush2.xpose.msra.mxu0 0.0
    %540 = vmatprep.subr.mxu0 0.0
    %541 = vmatpush2.xpose.msra.mxu0 0.0
    %542 = vmatprep.subr.mxu0 0.0
    %543 = vmatpush2.xpose.msra.mxu0 0.0
    %544 = vmatprep.subr.mxu0 0.0
    %545 = vmatpush2.xpose.msra.mxu0 0.0
    %546 = vmatprep.subr.mxu0 0.0
    %547 = vmatpush2.xpose.msra.mxu0 0.0
    %548 = vmatprep.mubr.f32.mxu0 0.0
    %549 = vmatmul.mubr.f32.gmra.mxu0 %v476
    %v550 = vpop.f32.mrf.mxu0
    %v551 = vadd.f32 0.0, %v550
    %v552 = vpop.f32.mrf.mxu0
    %553 = vmatprep.mubr.f32.mxu0 0.0
    %554 = vmatmul.mubr.f32.gmra.mxu0 %v478
    %v555 = vpop.f32.mrf.mxu0
    %v556 = vadd.f32 0.0, %v555
    %v557 = vpop.f32.mrf.mxu0
    %558 = vdwg.mxu0
    %v559 = vsel %vm70, %v431, 0
    %v561 = vsel %vm70, %v433, 0
    %v563 = vsel %vm70, %v445, 0
    %v565 = vsel %vm70, %v447, 0
    %567 = vmatprep.subr.mxu0 0.0
    %568 = vmatpush1.xpose.msra.mxu0 0.0
    %569 = vmatprep.subr.mxu0 0.0
    %570 = vmatpush1.xpose.msra.mxu0 0.0
    %571 = vmatprep.subr.mxu0 0.0
    %572 = vmatpush1.xpose.msra.mxu0 0.0
    %573 = vmatprep.subr.mxu0 0.0
    %574 = vmatpush1.xpose.msra.mxu0 0.0
    %575 = vmatprep.subr.mxu0 0.0
    %576 = vmatpush1.xpose.msra.mxu0 0.0
    %577 = vmatprep.subr.mxu0 0.0
    %578 = vmatpush1.xpose.msra.mxu0 0.0
    %579 = vmatprep.subr.mxu0 0.0
    %580 = vmatpush1.xpose.msra.mxu0 0.0
    %581 = vmatprep.subr.mxu0 0.0
    %582 = vmatpush1.xpose.msra.mxu0 0.0
    %583 = vmatprep.subr.mxu0 0.0
    %584 = vmatpush1.xpose.msra.mxu0 0.0
    %585 = vmatprep.subr.mxu0 0.0
    %586 = vmatpush1.xpose.msra.mxu0 0.0
    %587 = vmatprep.subr.mxu0 0.0
    %588 = vmatpush1.xpose.msra.mxu0 0.0
    %589 = vmatprep.subr.mxu0 0.0
    %590 = vmatpush1.xpose.msra.mxu0 0.0
    %591 = vmatprep.subr.mxu0 0.0
    %592 = vmatpush1.xpose.msra.mxu0 0.0
    %593 = vmatprep.subr.mxu0 0.0
    %594 = vmatpush1.xpose.msra.mxu0 0.0
    %595 = vmatprep.subr.mxu0 0.0
    %596 = vmatpush1.xpose.msra.mxu0 %v565
    %597 = vmatprep.subr.mxu0 0.0
    %598 = vmatpush1.xpose.msra.mxu0 %v563
    %599 = vmatprep.subr.mxu0 0.0
    %600 = vmatpush2.xpose.msra.mxu0 0.0
    %601 = vmatprep.subr.mxu0 0.0
    %602 = vmatpush2.xpose.msra.mxu0 0.0
    %603 = vmatprep.subr.mxu0 0.0
    %604 = vmatpush2.xpose.msra.mxu0 0.0
    %605 = vmatprep.subr.mxu0 0.0
    %606 = vmatpush2.xpose.msra.mxu0 0.0
    %607 = vmatprep.subr.mxu0 0.0
    %608 = vmatpush2.xpose.msra.mxu0 0.0
    %609 = vmatprep.subr.mxu0 0.0
    %610 = vmatpush2.xpose.msra.mxu0 0.0
    %611 = vmatprep.subr.mxu0 0.0
    %612 = vmatpush2.xpose.msra.mxu0 0.0
    %613 = vmatprep.subr.mxu0 0.0
    %614 = vmatpush2.xpose.msra.mxu0 0.0
    %615 = vmatprep.subr.mxu0 0.0
    %616 = vmatpush2.xpose.msra.mxu0 0.0
    %617 = vmatprep.subr.mxu0 0.0
    %618 = vmatpush2.xpose.msra.mxu0 0.0
    %619 = vmatprep.subr.mxu0 0.0
    %620 = vmatpush2.xpose.msra.mxu0 0.0
    %621 = vmatprep.subr.mxu0 0.0
    %622 = vmatpush2.xpose.msra.mxu0 0.0
    %623 = vmatprep.subr.mxu0 0.0
    %624 = vmatpush2.xpose.msra.mxu0 0.0
    %625 = vmatprep.subr.mxu0 0.0
    %626 = vmatpush2.xpose.msra.mxu0 0.0
    %627 = vmatprep.subr.mxu0 0.0
    %628 = vmatpush2.xpose.msra.mxu0 0.0
    %629 = vmatprep.subr.mxu0 0.0
    %630 = vmatpush2.xpose.msra.mxu0 0.0
    %631 = vmatprep.mubr.f32.mxu0 0.0
    %632 = vmatmul.mubr.f32.gmra.mxu0 %v559
    %v633 = vpop.f32.mrf.mxu0
    %v634 = vadd.f32 0.0, %v633
    %v635 = vpop.f32.mrf.mxu0
    %636 = vmatprep.mubr.f32.mxu0 0.0
    %637 = vmatmul.mubr.f32.gmra.mxu0 %v561
    %v638 = vpop.f32.mrf.mxu0
    %v639 = vadd.f32 0.0, %v638
    %v640 = vpop.f32.mrf.mxu0
    %641 = vdwg.mxu0
    %v642 = vsel %vm70, %v435, 0
    %v644 = vsel %vm70, %v437, 0
    %v646 = vsel %vm70, %v449, 0
    %v648 = vsel %vm70, %v451, 0
    %650 = vmatprep.subr.mxu0 0.0
    %651 = vmatpush1.xpose.msra.mxu0 0.0
    %652 = vmatprep.subr.mxu0 0.0
    %653 = vmatpush1.xpose.msra.mxu0 0.0
    %654 = vmatprep.subr.mxu0 0.0
    %655 = vmatpush1.xpose.msra.mxu0 0.0
    %656 = vmatprep.subr.mxu0 0.0
    %657 = vmatpush1.xpose.msra.mxu0 0.0
    %658 = vmatprep.subr.mxu0 0.0
    %659 = vmatpush1.xpose.msra.mxu0 0.0
    %660 = vmatprep.subr.mxu0 0.0
    %661 = vmatpush1.xpose.msra.mxu0 0.0
    %662 = vmatprep.subr.mxu0 0.0
    %663 = vmatpush1.xpose.msra.mxu0 0.0
    %664 = vmatprep.subr.mxu0 0.0
    %665 = vmatpush1.xpose.msra.mxu0 0.0
    %666 = vmatprep.subr.mxu0 0.0
    %667 = vmatpush1.xpose.msra.mxu0 0.0
    %668 = vmatprep.subr.mxu0 0.0
    %669 = vmatpush1.xpose.msra.mxu0 0.0
    %670 = vmatprep.subr.mxu0 0.0
    %671 = vmatpush1.xpose.msra.mxu0 0.0
    %672 = vmatprep.subr.mxu0 0.0
    %673 = vmatpush1.xpose.msra.mxu0 0.0
    %674 = vmatprep.subr.mxu0 0.0
    %675 = vmatpush1.xpose.msra.mxu0 0.0
    %676 = vmatprep.subr.mxu0 0.0
    %677 = vmatpush1.xpose.msra.mxu0 0.0
    %678 = vmatprep.subr.mxu0 0.0
    %679 = vmatpush1.xpose.msra.mxu0 %v648
    %680 = vmatprep.subr.mxu0 0.0
    %681 = vmatpush1.xpose.msra.mxu0 %v646
    %682 = vmatprep.subr.mxu0 0.0
    %683 = vmatpush2.xpose.msra.mxu0 0.0
    %684 = vmatprep.subr.mxu0 0.0
    %685 = vmatpush2.xpose.msra.mxu0 0.0
    %686 = vmatprep.subr.mxu0 0.0
    %687 = vmatpush2.xpose.msra.mxu0 0.0
    %688 = vmatprep.subr.mxu0 0.0
    %689 = vmatpush2.xpose.msra.mxu0 0.0
    %690 = vmatprep.subr.mxu0 0.0
    %691 = vmatpush2.xpose.msra.mxu0 0.0
    %692 = vmatprep.subr.mxu0 0.0
    %693 = vmatpush2.xpose.msra.mxu0 0.0
    %694 = vmatprep.subr.mxu0 0.0
    %695 = vmatpush2.xpose.msra.mxu0 0.0
    %696 = vmatprep.subr.mxu0 0.0
    %697 = vmatpush2.xpose.msra.mxu0 0.0
    %698 = vmatprep.subr.mxu0 0.0
    %699 = vmatpush2.xpose.msra.mxu0 0.0
    %700 = vmatprep.subr.mxu0 0.0
    %701 = vmatpush2.xpose.msra.mxu0 0.0
    %702 = vmatprep.subr.mxu0 0.0
    %703 = vmatpush2.xpose.msra.mxu0 0.0
    %704 = vmatprep.subr.mxu0 0.0
    %705 = vmatpush2.xpose.msra.mxu0 0.0
    %706 = vmatprep.subr.mxu0 0.0
    %707 = vmatpush2.xpose.msra.mxu0 0.0
    %708 = vmatprep.subr.mxu0 0.0
    %709 = vmatpush2.xpose.msra.mxu0 0.0
    %710 = vmatprep.subr.mxu0 0.0
    %711 = vmatpush2.xpose.msra.mxu0 0.0
    %712 = vmatprep.subr.mxu0 0.0
    %713 = vmatpush2.xpose.msra.mxu0 0.0
    %714 = vmatprep.mubr.f32.mxu0 0.0
    %715 = vmatmul.mubr.f32.gmra.mxu0 %v642
    %v716 = vpop.f32.mrf.mxu0
    %v717 = vadd.f32 0.0, %v716
    %v718 = vpop.f32.mrf.mxu0
    %719 = vmatprep.mubr.f32.mxu0 0.0
    %720 = vmatmul.mubr.f32.gmra.mxu0 %v644
    %v721 = vpop.f32.mrf.mxu0
    %v722 = vadd.f32 0.0, %v721
    %v723 = vpop.f32.mrf.mxu0
    %724 = vdwg.mxu0
    %v725 = vsel %vm70, %v439, 0
    %v727 = vsel %vm70, %v441, 0
    %v729 = vsel %vm70, %v453, 0
    %v731 = vsel %vm70, %v455, 0
    %733 = vmatprep.subr.mxu0 0.0
    %734 = vmatpush1.xpose.msra.mxu0 0.0
    %735 = vmatprep.subr.mxu0 0.0
    %736 = vmatpush1.xpose.msra.mxu0 0.0
    %737 = vmatprep.subr.mxu0 0.0
    %738 = vmatpush1.xpose.msra.mxu0 0.0
    %739 = vmatprep.subr.mxu0 0.0
    %740 = vmatpush1.xpose.msra.mxu0 0.0
    %741 = vmatprep.subr.mxu0 0.0
    %742 = vmatpush1.xpose.msra.mxu0 0.0
    %743 = vmatprep.subr.mxu0 0.0
    %744 = vmatpush1.xpose.msra.mxu0 0.0
    %745 = vmatprep.subr.mxu0 0.0
    %746 = vmatpush1.xpose.msra.mxu0 0.0
    %747 = vmatprep.subr.mxu0 0.0
    %748 = vmatpush1.xpose.msra.mxu0 0.0
    %749 = vmatprep.subr.mxu0 0.0
    %750 = vmatpush1.xpose.msra.mxu0 0.0
    %751 = vmatprep.subr.mxu0 0.0
    %752 = vmatpush1.xpose.msra.mxu0 0.0
    %753 = vmatprep.subr.mxu0 0.0
    %754 = vmatpush1.xpose.msra.mxu0 0.0
    %755 = vmatprep.subr.mxu0 0.0
    %756 = vmatpush1.xpose.msra.mxu0 0.0
    %757 = vmatprep.subr.mxu0 0.0
    %758 = vmatpush1.xpose.msra.mxu0 0.0
    %759 = vmatprep.subr.mxu0 0.0
    %760 = vmatpush1.xpose.msra.mxu0 0.0
    %761 = vmatprep.subr.mxu0 0.0
    %762 = vmatpush1.xpose.msra.mxu0 %v731
    %763 = vmatprep.subr.mxu0 0.0
    %764 = vmatpush1.xpose.msra.mxu0 %v729
    %765 = vmatprep.subr.mxu0 0.0
    %766 = vmatpush2.xpose.msra.mxu0 0.0
    %767 = vmatprep.subr.mxu0 0.0
    %768 = vmatpush2.xpose.msra.mxu0 0.0
    %769 = vmatprep.subr.mxu0 0.0
    %770 = vmatpush2.xpose.msra.mxu0 0.0
    %771 = vmatprep.subr.mxu0 0.0
    %772 = vmatpush2.xpose.msra.mxu0 0.0
    %773 = vmatprep.subr.mxu0 0.0
    %774 = vmatpush2.xpose.msra.mxu0 0.0
    %775 = vmatprep.subr.mxu0 0.0
    %776 = vmatpush2.xpose.msra.mxu0 0.0
    %777 = vmatprep.subr.mxu0 0.0
    %778 = vmatpush2.xpose.msra.mxu0 0.0
    %779 = vmatprep.subr.mxu0 0.0
    %780 = vmatpush2.xpose.msra.mxu0 0.0
    %781 = vmatprep.subr.mxu0 0.0
    %782 = vmatpush2.xpose.msra.mxu0 0.0
    %783 = vmatprep.subr.mxu0 0.0
    %784 = vmatpush2.xpose.msra.mxu0 0.0
    %785 = vmatprep.subr.mxu0 0.0
    %786 = vmatpush2.xpose.msra.mxu0 0.0
    %787 = vmatprep.subr.mxu0 0.0
    %788 = vmatpush2.xpose.msra.mxu0 0.0
    %789 = vmatprep.subr.mxu0 0.0
    %790 = vmatpush2.xpose.msra.mxu0 0.0
    %791 = vmatprep.subr.mxu0 0.0
    %792 = vmatpush2.xpose.msra.mxu0 0.0
    %793 = vmatprep.subr.mxu0 0.0
    %794 = vmatpush2.xpose.msra.mxu0 0.0
    %795 = vmatprep.subr.mxu0 0.0
    %796 = vmatpush2.xpose.msra.mxu0 0.0
    %797 = vmatprep.mubr.f32.mxu0 0.0
    %798 = vmatmul.mubr.f32.gmra.mxu0 %v725
    %v799 = vpop.f32.mrf.mxu0
    %v800 = vadd.f32 0.0, %v799
    %v801 = vpop.f32.mrf.mxu0
    %802 = vmatprep.mubr.f32.mxu0 0.0
    %803 = vmatmul.mubr.f32.gmra.mxu0 %v727
    %v804 = vpop.f32.mrf.mxu0
    %v805 = vadd.f32 0.0, %v804
    %v806 = vpop.f32.mrf.mxu0
    %807 = vdwg.mxu0
    %v808 = vmul.f32 %v551, 0.17677669
    %v809 = vmul.f32 %v556, 0.17677669
    %v810 = vmul.f32 %v634, 0.17677669
    %v811 = vmul.f32 %v639, 0.17677669
    %v812 = vmul.f32 %v717, 0.17677669
    %v813 = vmul.f32 %v722, 0.17677669
    %v814 = vmul.f32 %v800, 0.17677669
    %v815 = vmul.f32 %v805, 0.17677669
    %v816 = vld [vmem:[%s1] sm:$0xff]
    %v817 = vld [vmem:[%s1 + $0x8] sm:$0xff]
    %vm818 = vcmp.ne.f32.partialorder %v816, 0.0
    %vm819 = vcmp.ne.f32.partialorder %v817, 0.0
    %v820 = vsel %vm818, 1, 0
    %v821 = vsel %vm819, 1, 0
    %vm822 = vcmp.eq.s32.totalorder %v820, 1
    %vm823 = vcmp.eq.s32.totalorder %v821, 1
    %v824 = vsel %vm822, %v808, -1e+09
    %v825 = vsel %vm823, %v809, -1e+09
    %v826 = vsel %vm822, %v810, -1e+09
    %v827 = vsel %vm823, %v811, -1e+09
    %v828 = vsel %vm822, %v812, -1e+09
    %v829 = vsel %vm823, %v813, -1e+09
    %v830 = vsel %vm822, %v814, -1e+09
    %v831 = vsel %vm823, %v815, -1e+09
    %v832 = vsel %vm259, %v824, -inf
    %833 = vmax.xlane.f32.xlu0 %v832
    %v834 = vpop.xlane.xlu0 %833
    %v835 = vsel %vm259, %v825, -inf
    %836 = vmax.xlane.f32.xlu0 %v835
    %v837 = vpop.xlane.xlu0 %836
    %v838 = vsel %vm259, %v826, -inf
    %839 = vmax.xlane.f32.xlu0 %v838
    %v840 = vpop.xlane.xlu0 %839
    %v841 = vsel %vm259, %v827, -inf
    %842 = vmax.xlane.f32.xlu0 %v841
    %v843 = vpop.xlane.xlu0 %842
    %v844 = vsel %vm259, %v828, -inf
    %845 = vmax.xlane.f32.xlu0 %v844
    %v846 = vpop.xlane.xlu0 %845
    %v847 = vsel %vm259, %v829, -inf
    %848 = vmax.xlane.f32.xlu0 %v847
    %v849 = vpop.xlane.xlu0 %848
    %v850 = vsel %vm259, %v830, -inf
    %851 = vmax.xlane.f32.xlu0 %v850
    %v852 = vpop.xlane.xlu0 %851
    %v853 = vsel %vm259, %v831, -inf
    %854 = vmax.xlane.f32.xlu0 %v853
    %v855 = vpop.xlane.xlu0 %854
    %v856 = vsub.f32 %v824, %v834
    %v857 = vsub.f32 %v825, %v837
    %v858 = vsub.f32 %v826, %v840
    %v859 = vsub.f32 %v827, %v843
    %v860 = vsub.f32 %v828, %v846
    %v861 = vsub.f32 %v829, %v849
    %v862 = vsub.f32 %v830, %v852
    %v863 = vsub.f32 %v831, %v855
    %v864 = vmul.f32 %v856, 1.442695
    %v865 = vpow.pop %v864
    %v866 = vmul.f32 %v857, 1.442695
    %v867 = vpow.pop %v866
    %v868 = vmul.f32 %v858, 1.442695
    %v869 = vpow.pop %v868
    %v870 = vmul.f32 %v859, 1.442695
    %v871 = vpow.pop %v870
    %v872 = vmul.f32 %v860, 1.442695
    %v873 = vpow.pop %v872
    %v874 = vmul.f32 %v861, 1.442695
    %v875 = vpow.pop %v874
    %v876 = vmul.f32 %v862, 1.442695
    %v877 = vpow.pop %v876
    %v878 = vmul.f32 %v863, 1.442695
    %v879 = vpow.pop %v878
    %v880 = vsel %vm259, %v865, 0.0
    %881 = vadd.xlane.f32.xlu0 %v880
    %v882 = vpop.xlane.xlu0 %881
    %v883 = vsel %vm259, %v867, 0.0
    %884 = vadd.xlane.f32.xlu0 %v883
    %v885 = vpop.xlane.xlu0 %884
    %v886 = vsel %vm259, %v869, 0.0
    %887 = vadd.xlane.f32.xlu0 %v886
    %v888 = vpop.xlane.xlu0 %887
    %v889 = vsel %vm259, %v871, 0.0
    %890 = vadd.xlane.f32.xlu0 %v889
    %v891 = vpop.xlane.xlu0 %890
    %v892 = vsel %vm259, %v873, 0.0
    %893 = vadd.xlane.f32.xlu0 %v892
    %v894 = vpop.xlane.xlu0 %893
    %v895 = vsel %vm259, %v875, 0.0
    %896 = vadd.xlane.f32.xlu0 %v895
    %v897 = vpop.xlane.xlu0 %896
    %v898 = vsel %vm259, %v877, 0.0
    %899 = vadd.xlane.f32.xlu0 %v898
    %v900 = vpop.xlane.xlu0 %899
    %v901 = vsel %vm259, %v879, 0.0
    %902 = vadd.xlane.f32.xlu0 %v901
    %v903 = vpop.xlane.xlu0 %902
    %v904 = vrcp.pop %v882
    %v905 = vrcp.pop %v885
    %v906 = vrcp.pop %v888
    %v907 = vrcp.pop %v891
    %v908 = vrcp.pop %v894
    %v909 = vrcp.pop %v897
    %v910 = vrcp.pop %v900
    %v911 = vrcp.pop %v903
    %v912 = vmul.f32 %v882, %v904
    %v913 = vmul.f32 %v885, %v905
    %v914 = vmul.f32 %v888, %v906
    %v915 = vmul.f32 %v891, %v907
    %v916 = vmul.f32 %v894, %v908
    %v917 = vmul.f32 %v897, %v909
    %v918 = vmul.f32 %v900, %v910
    %v919 = vmul.f32 %v903, %v911
    %v920 = vsub.f32 2.0, %v912
    %v921 = vsub.f32 2.0, %v913
    %v922 = vsub.f32 2.0, %v914
    %v923 = vsub.f32 2.0, %v915
    %v924 = vsub.f32 2.0, %v916
    %v925 = vsub.f32 2.0, %v917
    %v926 = vsub.f32 2.0, %v918
    %v927 = vsub.f32 2.0, %v919
    %v928 = vmul.f32 %v904, %v920
    %v929 = vmul.f32 %v905, %v921
    %v930 = vmul.f32 %v906, %v922
    %v931 = vmul.f32 %v907, %v923
    %v932 = vmul.f32 %v908, %v924
    %v933 = vmul.f32 %v909, %v925
    %v934 = vmul.f32 %v910, %v926
    %v935 = vmul.f32 %v911, %v927
    %v936 = vmul.f32 %v865, %v928
    %v937 = vmul.f32 %v867, %v929
    %v938 = vmul.f32 %v869, %v930
    %v939 = vmul.f32 %v871, %v931
    %v940 = vmul.f32 %v873, %v932
    %v941 = vmul.f32 %v875, %v933
    %v942 = vmul.f32 %v877, %v934
    %v943 = vmul.f32 %v879, %v935
    %v945 = vsel %vm259, %v936, 0
    %v948 = vsel %vm259, %v937, 0
    %950 = vmatprep.subr.mxu0 0.0
    %951 = vmatpush1.msra.mxu0 0.0
    %952 = vmatprep.subr.mxu0 0.0
    %953 = vmatpush1.msra.mxu0 0.0
    %954 = vmatprep.subr.mxu0 0.0
    %955 = vmatpush1.msra.mxu0 0.0
    %956 = vmatprep.subr.mxu0 0.0
    %957 = vmatpush1.msra.mxu0 0.0
    %958 = vmatprep.subr.mxu0 0.0
    %959 = vmatpush1.msra.mxu0 0.0
    %960 = vmatprep.subr.mxu0 0.0
    %961 = vmatpush1.msra.mxu0 0.0
    %962 = vmatprep.subr.mxu0 0.0
    %963 = vmatpush1.msra.mxu0 0.0
    %964 = vmatprep.subr.mxu0 0.0
    %965 = vmatpush1.msra.mxu0 0.0
    %966 = vmatprep.subr.mxu0 0.0
    %967 = vmatpush1.msra.mxu0 0.0
    %968 = vmatprep.subr.mxu0 0.0
    %969 = vmatpush1.msra.mxu0 0.0
    %970 = vmatprep.subr.mxu0 0.0
    %971 = vmatpush1.msra.mxu0 0.0
    %972 = vmatprep.subr.mxu0 0.0
    %973 = vmatpush1.msra.mxu0 0.0
    %974 = vmatprep.subr.mxu0 0.0
    %975 = vmatpush1.msra.mxu0 0.0
    %976 = vmatprep.subr.mxu0 0.0
    %977 = vmatpush1.msra.mxu0 0.0
    %978 = vmatprep.subr.mxu0 0.0
    %979 = vmatpush1.msra.mxu0 %v149
    %980 = vmatprep.subr.mxu0 0.0
    %981 = vmatpush1.msra.mxu0 %v144
    %982 = vmatprep.subr.mxu0 0.0
    %983 = vmatpush2.msra.mxu0 0.0
    %984 = vmatprep.subr.mxu0 0.0
    %985 = vmatpush2.msra.mxu0 0.0
    %986 = vmatprep.subr.mxu0 0.0
    %987 = vmatpush2.msra.mxu0 0.0
    %988 = vmatprep.subr.mxu0 0.0
    %989 = vmatpush2.msra.mxu0 0.0
    %990 = vmatprep.subr.mxu0 0.0
    %991 = vmatpush2.msra.mxu0 0.0
    %992 = vmatprep.subr.mxu0 0.0
    %993 = vmatpush2.msra.mxu0 0.0
    %994 = vmatprep.subr.mxu0 0.0
    %995 = vmatpush2.msra.mxu0 0.0
    %996 = vmatprep.subr.mxu0 0.0
    %997 = vmatpush2.msra.mxu0 0.0
    %998 = vmatprep.subr.mxu0 0.0
    %999 = vmatpush2.msra.mxu0 0.0
    %1000 = vmatprep.subr.mxu0 0.0
    %1001 = vmatpush2.msra.mxu0 0.0
    %1002 = vmatprep.subr.mxu0 0.0
    %1003 = vmatpush2.msra.mxu0 0.0
    %1004 = vmatprep.subr.mxu0 0.0
    %1005 = vmatpush2.msra.mxu0 0.0
    %1006 = vmatprep.subr.mxu0 0.0
    %1007 = vmatpush2.msra.mxu0 0.0
    %1008 = vmatprep.subr.mxu0 0.0
    %1009 = vmatpush2.msra.mxu0 0.0
    %1010 = vmatprep.subr.mxu0 0.0
    %1011 = vmatpush2.msra.mxu0 0.0
    %1012 = vmatprep.subr.mxu0 0.0
    %1013 = vmatpush2.msra.mxu0 0.0
    %1014 = vmatprep.mubr.f32.mxu0 0.0
    %1015 = vmatmul.mubr.f32.gmra.mxu0 %v945
    %v1016 = vpop.f32.mrf.mxu0
    %v1017 = vadd.f32 0.0, %v1016
    %v1018 = vpop.f32.mrf.mxu0
    %1019 = vmatprep.mubr.f32.mxu0 0.0
    %1020 = vmatmul.mubr.f32.gmra.mxu0 %v948
    %v1021 = vpop.f32.mrf.mxu0
    %v1022 = vadd.f32 0.0, %v1021
    %v1023 = vpop.f32.mrf.mxu0
    %1024 = vdwg.mxu0
    %v1026 = vsel %vm259, %v938, 0
    %v1029 = vsel %vm259, %v939, 0
    %1031 = vmatprep.subr.mxu0 0.0
    %1032 = vmatpush1.msra.mxu0 0.0
    %1033 = vmatprep.subr.mxu0 0.0
    %1034 = vmatpush1.msra.mxu0 0.0
    %1035 = vmatprep.subr.mxu0 0.0
    %1036 = vmatpush1.msra.mxu0 0.0
    %1037 = vmatprep.subr.mxu0 0.0
    %1038 = vmatpush1.msra.mxu0 0.0
    %1039 = vmatprep.subr.mxu0 0.0
    %1040 = vmatpush1.msra.mxu0 0.0
    %1041 = vmatprep.subr.mxu0 0.0
    %1042 = vmatpush1.msra.mxu0 0.0
    %1043 = vmatprep.subr.mxu0 0.0
    %1044 = vmatpush1.msra.mxu0 0.0
    %1045 = vmatprep.subr.mxu0 0.0
    %1046 = vmatpush1.msra.mxu0 0.0
    %1047 = vmatprep.subr.mxu0 0.0
    %1048 = vmatpush1.msra.mxu0 0.0
    %1049 = vmatprep.subr.mxu0 0.0
    %1050 = vmatpush1.msra.mxu0 0.0
    %1051 = vmatprep.subr.mxu0 0.0
    %1052 = vmatpush1.msra.mxu0 0.0
    %1053 = vmatprep.subr.mxu0 0.0
    %1054 = vmatpush1.msra.mxu0 0.0
    %1055 = vmatprep.subr.mxu0 0.0
    %1056 = vmatpush1.msra.mxu0 0.0
    %1057 = vmatprep.subr.mxu0 0.0
    %1058 = vmatpush1.msra.mxu0 0.0
    %1059 = vmatprep.subr.mxu0 0.0
    %1060 = vmatpush1.msra.mxu0 %v461
    %1061 = vmatprep.subr.mxu0 0.0
    %1062 = vmatpush1.msra.mxu0 %v459
    %1063 = vmatprep.subr.mxu0 0.0
    %1064 = vmatpush2.msra.mxu0 0.0
    %1065 = vmatprep.subr.mxu0 0.0
    %1066 = vmatpush2.msra.mxu0 0.0
    %1067 = vmatprep.subr.mxu0 0.0
    %1068 = vmatpush2.msra.mxu0 0.0
    %1069 = vmatprep.subr.mxu0 0.0
    %1070 = vmatpush2.msra.mxu0 0.0
    %1071 = vmatprep.subr.mxu0 0.0
    %1072 = vmatpush2.msra.mxu0 0.0
    %1073 = vmatprep.subr.mxu0 0.0
    %1074 = vmatpush2.msra.mxu0 0.0
    %1075 = vmatprep.subr.mxu0 0.0
    %1076 = vmatpush2.msra.mxu0 0.0
    %1077 = vmatprep.subr.mxu0 0.0
    %1078 = vmatpush2.msra.mxu0 0.0
    %1079 = vmatprep.subr.mxu0 0.0
    %1080 = vmatpush2.msra.mxu0 0.0
    %1081 = vmatprep.subr.mxu0 0.0
    %1082 = vmatpush2.msra.mxu0 0.0
    %1083 = vmatprep.subr.mxu0 0.0
    %1084 = vmatpush2.msra.mxu0 0.0
    %1085 = vmatprep.subr.mxu0 0.0
    %1086 = vmatpush2.msra.mxu0 0.0
    %1087 = vmatprep.subr.mxu0 0.0
    %1088 = vmatpush2.msra.mxu0 0.0
    %1089 = vmatprep.subr.mxu0 0.0
    %1090 = vmatpush2.msra.mxu0 0.0
    %1091 = vmatprep.subr.mxu0 0.0
    %1092 = vmatpush2.msra.mxu0 0.0
    %1093 = vmatprep.subr.mxu0 0.0
    %1094 = vmatpush2.msra.mxu0 0.0
    %1095 = vmatprep.mubr.f32.mxu0 0.0
    %1096 = vmatmul.mubr.f32.gmra.mxu0 %v1026
    %v1097 = vpop.f32.mrf.mxu0
    %v1098 = vadd.f32 0.0, %v1097
    %v1099 = vpop.f32.mrf.mxu0
    %1100 = vmatprep.mubr.f32.mxu0 0.0
    %1101 = vmatmul.mubr.f32.gmra.mxu0 %v1029
    %v1102 = vpop.f32.mrf.mxu0
    %v1103 = vadd.f32 0.0, %v1102
    %v1104 = vpop.f32.mrf.mxu0
    %1105 = vdwg.mxu0
    %v1107 = vsel %vm259, %v940, 0
    %v1110 = vsel %vm259, %v941, 0
    %1112 = vmatprep.subr.mxu0 0.0
    %1113 = vmatpush1.msra.mxu0 0.0
    %1114 = vmatprep.subr.mxu0 0.0
    %1115 = vmatpush1.msra.mxu0 0.0
    %1116 = vmatprep.subr.mxu0 0.0
    %1117 = vmatpush1.msra.mxu0 0.0
    %1118 = vmatprep.subr.mxu0 0.0
    %1119 = vmatpush1.msra.mxu0 0.0
    %1120 = vmatprep.subr.mxu0 0.0
    %1121 = vmatpush1.msra.mxu0 0.0
    %1122 = vmatprep.subr.mxu0 0.0
    %1123 = vmatpush1.msra.mxu0 0.0
    %1124 = vmatprep.subr.mxu0 0.0
    %1125 = vmatpush1.msra.mxu0 0.0
    %1126 = vmatprep.subr.mxu0 0.0
    %1127 = vmatpush1.msra.mxu0 0.0
    %1128 = vmatprep.subr.mxu0 0.0
    %1129 = vmatpush1.msra.mxu0 0.0
    %1130 = vmatprep.subr.mxu0 0.0
    %1131 = vmatpush1.msra.mxu0 0.0
    %1132 = vmatprep.subr.mxu0 0.0
    %1133 = vmatpush1.msra.mxu0 0.0
    %1134 = vmatprep.subr.mxu0 0.0
    %1135 = vmatpush1.msra.mxu0 0.0
    %1136 = vmatprep.subr.mxu0 0.0
    %1137 = vmatpush1.msra.mxu0 0.0
    %1138 = vmatprep.subr.mxu0 0.0
    %1139 = vmatpush1.msra.mxu0 0.0
    %1140 = vmatprep.subr.mxu0 0.0
    %1141 = vmatpush1.msra.mxu0 %v467
    %1142 = vmatprep.subr.mxu0 0.0
    %1143 = vmatpush1.msra.mxu0 %v465
    %1144 = vmatprep.subr.mxu0 0.0
    %1145 = vmatpush2.msra.mxu0 0.0
    %1146 = vmatprep.subr.mxu0 0.0
    %1147 = vmatpush2.msra.mxu0 0.0
    %1148 = vmatprep.subr.mxu0 0.0
    %1149 = vmatpush2.msra.mxu0 0.0
    %1150 = vmatprep.subr.mxu0 0.0
    %1151 = vmatpush2.msra.mxu0 0.0
    %1152 = vmatprep.subr.mxu0 0.0
    %1153 = vmatpush2.msra.mxu0 0.0
    %1154 = vmatprep.subr.mxu0 0.0
    %1155 = vmatpush2.msra.mxu0 0.0
    %1156 = vmatprep.subr.mxu0 0.0
    %1157 = vmatpush2.msra.mxu0 0.0
    %1158 = vmatprep.subr.mxu0 0.0
    %1159 = vmatpush2.msra.mxu0 0.0
    %1160 = vmatprep.subr.mxu0 0.0
    %1161 = vmatpush2.msra.mxu0 0.0
    %1162 = vmatprep.subr.mxu0 0.0
    %1163 = vmatpush2.msra.mxu0 0.0
    %1164 = vmatprep.subr.mxu0 0.0
    %1165 = vmatpush2.msra.mxu0 0.0
    %1166 = vmatprep.subr.mxu0 0.0
    %1167 = vmatpush2.msra.mxu0 0.0
    %1168 = vmatprep.subr.mxu0 0.0
    %1169 = vmatpush2.msra.mxu0 0.0
    %1170 = vmatprep.subr.mxu0 0.0
    %1171 = vmatpush2.msra.mxu0 0.0
    %1172 = vmatprep.subr.mxu0 0.0
    %1173 = vmatpush2.msra.mxu0 0.0
    %1174 = vmatprep.subr.mxu0 0.0
    %1175 = vmatpush2.msra.mxu0 0.0
    %1176 = vmatprep.mubr.f32.mxu0 0.0
    %1177 = vmatmul.mubr.f32.gmra.mxu0 %v1107
    %v1178 = vpop.f32.mrf.mxu0
    %v1179 = vadd.f32 0.0, %v1178
    %v1180 = vpop.f32.mrf.mxu0
    %1181 = vmatprep.mubr.f32.mxu0 0.0
    %1182 = vmatmul.mubr.f32.gmra.mxu0 %v1110
    %v1183 = vpop.f32.mrf.mxu0
    %v1184 = vadd.f32 0.0, %v1183
    %v1185 = vpop.f32.mrf.mxu0
    %1186 = vdwg.mxu0
    %v1188 = vsel %vm259, %v942, 0
    %v1191 = vsel %vm259, %v943, 0
    %1193 = vmatprep.subr.mxu0 0.0
    %1194 = vmatpush1.msra.mxu0 0.0
    %1195 = vmatprep.subr.mxu0 0.0
    %1196 = vmatpush1.msra.mxu0 0.0
    %1197 = vmatprep.subr.mxu0 0.0
    %1198 = vmatpush1.msra.mxu0 0.0
    %1199 = vmatprep.subr.mxu0 0.0
    %1200 = vmatpush1.msra.mxu0 0.0
    %1201 = vmatprep.subr.mxu0 0.0
    %1202 = vmatpush1.msra.mxu0 0.0
    %1203 = vmatprep.subr.mxu0 0.0
    %1204 = vmatpush1.msra.mxu0 0.0
    %1205 = vmatprep.subr.mxu0 0.0
    %1206 = vmatpush1.msra.mxu0 0.0
    %1207 = vmatprep.subr.mxu0 0.0
    %1208 = vmatpush1.msra.mxu0 0.0
    %1209 = vmatprep.subr.mxu0 0.0
    %1210 = vmatpush1.msra.mxu0 0.0
    %1211 = vmatprep.subr.mxu0 0.0
    %1212 = vmatpush1.msra.mxu0 0.0
    %1213 = vmatprep.subr.mxu0 0.0
    %1214 = vmatpush1.msra.mxu0 0.0
    %1215 = vmatprep.subr.mxu0 0.0
    %1216 = vmatpush1.msra.mxu0 0.0
    %1217 = vmatprep.subr.mxu0 0.0
    %1218 = vmatpush1.msra.mxu0 0.0
    %1219 = vmatprep.subr.mxu0 0.0
    %1220 = vmatpush1.msra.mxu0 0.0
    %1221 = vmatprep.subr.mxu0 0.0
    %1222 = vmatpush1.msra.mxu0 %v473
    %1223 = vmatprep.subr.mxu0 0.0
    %1224 = vmatpush1.msra.mxu0 %v471
    %1225 = vmatprep.subr.mxu0 0.0
    %1226 = vmatpush2.msra.mxu0 0.0
    %1227 = vmatprep.subr.mxu0 0.0
    %1228 = vmatpush2.msra.mxu0 0.0
    %1229 = vmatprep.subr.mxu0 0.0
    %1230 = vmatpush2.msra.mxu0 0.0
    %1231 = vmatprep.subr.mxu0 0.0
    %1232 = vmatpush2.msra.mxu0 0.0
    %1233 = vmatprep.subr.mxu0 0.0
    %1234 = vmatpush2.msra.mxu0 0.0
    %1235 = vmatprep.subr.mxu0 0.0
    %1236 = vmatpush2.msra.mxu0 0.0
    %1237 = vmatprep.subr.mxu0 0.0
    %1238 = vmatpush2.msra.mxu0 0.0
    %1239 = vmatprep.subr.mxu0 0.0
    %1240 = vmatpush2.msra.mxu0 0.0
    %1241 = vmatprep.subr.mxu0 0.0
    %1242 = vmatpush2.msra.mxu0 0.0
    %1243 = vmatprep.subr.mxu0 0.0
    %1244 = vmatpush2.msra.mxu0 0.0
    %1245 = vmatprep.subr.mxu0 0.0
    %1246 = vmatpush2.msra.mxu0 0.0
    %1247 = vmatprep.subr.mxu0 0.0
    %1248 = vmatpush2.msra.mxu0 0.0
    %1249 = vmatprep.subr.mxu0 0.0
    %1250 = vmatpush2.msra.mxu0 0.0
    %1251 = vmatprep.subr.mxu0 0.0
    %1252 = vmatpush2.msra.mxu0 0.0
    %1253 = vmatprep.subr.mxu0 0.0
    %1254 = vmatpush2.msra.mxu0 0.0
    %1255 = vmatprep.subr.mxu0 0.0
    %1256 = vmatpush2.msra.mxu0 0.0
    %1257 = vmatprep.mubr.f32.mxu0 0.0
    %1258 = vmatmul.mubr.f32.gmra.mxu0 %v1188
    %v1259 = vpop.f32.mrf.mxu0
    %v1260 = vadd.f32 0.0, %v1259
    %v1261 = vpop.f32.mrf.mxu0
    %1262 = vmatprep.mubr.f32.mxu0 0.0
    %1263 = vmatmul.mubr.f32.gmra.mxu0 %v1191
    %v1264 = vpop.f32.mrf.mxu0
    %v1265 = vadd.f32 0.0, %v1264
    %v1266 = vpop.f32.mrf.mxu0
    %1267 = vdwg.mxu0
    %v1268 = vld [vmem:[%s7] sm:$0xff]
    %v1269 = vld [vmem:[%s7 + $0x8] sm:$0xff]
    %v1270 = vld [vmem:[%s7 + $0x10] sm:$0xff]
    %v1271 = vld [vmem:[%s7 + $0x18] sm:$0xff]
    %v1272 = vld [vmem:[%s7 + $0x20] sm:$0xff]
    %v1273 = vld [vmem:[%s7 + $0x28] sm:$0xff]
    %v1274 = vld [vmem:[%s7 + $0x30] sm:$0xff]
    %v1275 = vld [vmem:[%s7 + $0x38] sm:$0xff]
    %v1276 = vld [vmem:[%s7 + $0x40] sm:$0xff]
    %v1277 = vld [vmem:[%s7 + $0x48] sm:$0xff]
    %v1278 = vld [vmem:[%s7 + $0x50] sm:$0xff]
    %v1279 = vld [vmem:[%s7 + $0x58] sm:$0xff]
    %v1280 = vld [vmem:[%s7 + $0x60] sm:$0xff]
    %v1281 = vld [vmem:[%s7 + $0x68] sm:$0xff]
    %v1282 = vld [vmem:[%s7 + $0x70] sm:$0xff]
    %v1283 = vld [vmem:[%s7 + $0x78] sm:$0xff]
    %v1285 = vsel %vm70, %v1098, 0
    %v1288 = vsel %vm70, %v1103, 0
    %1290 = vmatprep.subr.mxu0 0.0
    %1291 = vmatpush1.msra.mxu0 0.0
    %1292 = vmatprep.subr.mxu0 0.0
    %1293 = vmatpush1.msra.mxu0 0.0
    %1294 = vmatprep.subr.mxu0 0.0
    %1295 = vmatpush1.msra.mxu0 0.0
    %1296 = vmatprep.subr.mxu0 0.0
    %1297 = vmatpush1.msra.mxu0 0.0
    %1298 = vmatprep.subr.mxu0 0.0
    %1299 = vmatpush1.msra.mxu0 0.0
    %1300 = vmatprep.subr.mxu0 0.0
    %1301 = vmatpush1.msra.mxu0 0.0
    %1302 = vmatprep.subr.mxu0 0.0
    %1303 = vmatpush1.msra.mxu0 0.0
    %1304 = vmatprep.subr.mxu0 0.0
    %1305 = vmatpush1.msra.mxu0 0.0
    %1306 = vmatprep.subr.mxu0 0.0
    %1307 = vmatpush1.msra.mxu0 0.0
    %1308 = vmatprep.subr.mxu0 0.0
    %1309 = vmatpush1.msra.mxu0 0.0
    %1310 = vmatprep.subr.mxu0 0.0
    %1311 = vmatpush1.msra.mxu0 0.0
    %1312 = vmatprep.subr.mxu0 0.0
    %1313 = vmatpush1.msra.mxu0 0.0
    %1314 = vmatprep.subr.mxu0 0.0
    %1315 = vmatpush1.msra.mxu0 %v1275
    %1316 = vmatprep.subr.mxu0 0.0
    %1317 = vmatpush1.msra.mxu0 %v1274
    %1318 = vmatprep.subr.mxu0 0.0
    %1319 = vmatpush1.msra.mxu0 %v1273
    %1320 = vmatprep.subr.mxu0 0.0
    %1321 = vmatpush1.msra.mxu0 %v1272
    %1322 = vmatprep.subr.mxu0 0.0
    %1323 = vmatpush2.msra.mxu0 0.0
    %1324 = vmatprep.subr.mxu0 0.0
    %1325 = vmatpush2.msra.mxu0 0.0
    %1326 = vmatprep.subr.mxu0 0.0
    %1327 = vmatpush2.msra.mxu0 0.0
    %1328 = vmatprep.subr.mxu0 0.0
    %1329 = vmatpush2.msra.mxu0 0.0
    %1330 = vmatprep.subr.mxu0 0.0
    %1331 = vmatpush2.msra.mxu0 0.0
    %1332 = vmatprep.subr.mxu0 0.0
    %1333 = vmatpush2.msra.mxu0 0.0
    %1334 = vmatprep.subr.mxu0 0.0
    %1335 = vmatpush2.msra.mxu0 0.0
    %1336 = vmatprep.subr.mxu0 0.0
    %1337 = vmatpush2.msra.mxu0 0.0
    %1338 = vmatprep.subr.mxu0 0.0
    %1339 = vmatpush2.msra.mxu0 0.0
    %1340 = vmatprep.subr.mxu0 0.0
    %1341 = vmatpush2.msra.mxu0 0.0
    %1342 = vmatprep.subr.mxu0 0.0
    %1343 = vmatpush2.msra.mxu0 0.0
    %1344 = vmatprep.subr.mxu0 0.0
    %1345 = vmatpush2.msra.mxu0 0.0
    %1346 = vmatprep.subr.mxu0 0.0
    %1347 = vmatpush2.msra.mxu0 0.0
    %1348 = vmatprep.subr.mxu0 0.0
    %1349 = vmatpush2.msra.mxu0 0.0
    %1350 = vmatprep.subr.mxu0 0.0
    %1351 = vmatpush2.msra.mxu0 0.0
    %1352 = vmatprep.subr.mxu0 0.0
    %1353 = vmatpush2.msra.mxu0 0.0
    %1354 = vmatprep.mubr.f32.mxu0 0.0
    %1355 = vmatmul.mubr.f32.gmra.mxu0 %v1285
    %v1356 = vpop.f32.mrf.mxu0
    %v1357 = vadd.f32 0.0, %v1356
    %v1358 = vpop.f32.mrf.mxu0
    %1359 = vmatprep.mubr.f32.mxu0 0.0
    %1360 = vmatmul.mubr.f32.gmra.mxu0 %v1288
    %v1361 = vpop.f32.mrf.mxu0
    %v1362 = vadd.f32 0.0, %v1361
    %v1363 = vpop.f32.mrf.mxu0
    %1364 = vdwg.mxu0
    %v1366 = vsel %vm70, %v1017, 0
    %v1369 = vsel %vm70, %v1022, 0
    %1371 = vmatprep.subr.mxu0 0.0
    %1372 = vmatpush1.msra.mxu0 0.0
    %1373 = vmatprep.subr.mxu0 0.0
    %1374 = vmatpush1.msra.mxu0 0.0
    %1375 = vmatprep.subr.mxu0 0.0
    %1376 = vmatpush1.msra.mxu0 0.0
    %1377 = vmatprep.subr.mxu0 0.0
    %1378 = vmatpush1.msra.mxu0 0.0
    %1379 = vmatprep.subr.mxu0 0.0
    %1380 = vmatpush1.msra.mxu0 0.0
    %1381 = vmatprep.subr.mxu0 0.0
    %1382 = vmatpush1.msra.mxu0 0.0
    %1383 = vmatprep.subr.mxu0 0.0
    %1384 = vmatpush1.msra.mxu0 0.0
    %1385 = vmatprep.subr.mxu0 0.0
    %1386 = vmatpush1.msra.mxu0 0.0
    %1387 = vmatprep.subr.mxu0 0.0
    %1388 = vmatpush1.msra.mxu0 0.0
    %1389 = vmatprep.subr.mxu0 0.0
    %1390 = vmatpush1.msra.mxu0 0.0
    %1391 = vmatprep.subr.mxu0 0.0
    %1392 = vmatpush1.msra.mxu0 0.0
    %1393 = vmatprep.subr.mxu0 0.0
    %1394 = vmatpush1.msra.mxu0 0.0
    %1395 = vmatprep.subr.mxu0 0.0
    %1396 = vmatpush1.msra.mxu0 %v1271
    %1397 = vmatprep.subr.mxu0 0.0
    %1398 = vmatpush1.msra.mxu0 %v1270
    %1399 = vmatprep.subr.mxu0 0.0
    %1400 = vmatpush1.msra.mxu0 %v1269
    %1401 = vmatprep.subr.mxu0 0.0
    %1402 = vmatpush1.msra.mxu0 %v1268
    %1403 = vmatprep.subr.mxu0 0.0
    %1404 = vmatpush2.msra.mxu0 0.0
    %1405 = vmatprep.subr.mxu0 0.0
    %1406 = vmatpush2.msra.mxu0 0.0
    %1407 = vmatprep.subr.mxu0 0.0
    %1408 = vmatpush2.msra.mxu0 0.0
    %1409 = vmatprep.subr.mxu0 0.0
    %1410 = vmatpush2.msra.mxu0 0.0
    %1411 = vmatprep.subr.mxu0 0.0
    %1412 = vmatpush2.msra.mxu0 0.0
    %1413 = vmatprep.subr.mxu0 0.0
    %1414 = vmatpush2.msra.mxu0 0.0
    %1415 = vmatprep.subr.mxu0 0.0
    %1416 = vmatpush2.msra.mxu0 0.0
    %1417 = vmatprep.subr.mxu0 0.0
    %1418 = vmatpush2.msra.mxu0 0.0
    %1419 = vmatprep.subr.mxu0 0.0
    %1420 = vmatpush2.msra.mxu0 0.0
    %1421 = vmatprep.subr.mxu0 0.0
    %1422 = vmatpush2.msra.mxu0 0.0
    %1423 = vmatprep.subr.mxu0 0.0
    %1424 = vmatpush2.msra.mxu0 0.0
    %1425 = vmatprep.subr.mxu0 0.0
    %1426 = vmatpush2.msra.mxu0 0.0
    %1427 = vmatprep.subr.mxu0 0.0
    %1428 = vmatpush2.msra.mxu0 0.0
    %1429 = vmatprep.subr.mxu0 0.0
    %1430 = vmatpush2.msra.mxu0 0.0
    %1431 = vmatprep.subr.mxu0 0.0
    %1432 = vmatpush2.msra.mxu0 0.0
    %1433 = vmatprep.subr.mxu0 0.0
    %1434 = vmatpush2.msra.mxu0 0.0
    %1435 = vmatprep.mubr.f32.mxu0 0.0
    %1436 = vmatmul.mubr.f32.gmra.mxu0 %v1366
    %v1437 = vpop.f32.mrf.mxu0
    %v1438 = vadd.f32 %v1357, %v1437
    %v1439 = vpop.f32.mrf.mxu0
    %1440 = vmatprep.mubr.f32.mxu0 0.0
    %1441 = vmatmul.mubr.f32.gmra.mxu0 %v1369
    %v1442 = vpop.f32.mrf.mxu0
    %v1443 = vadd.f32 %v1362, %v1442
    %v1444 = vpop.f32.mrf.mxu0
    %1445 = vdwg.mxu0
    %v1447 = vsel %vm70, %v1179, 0
    %v1450 = vsel %vm70, %v1184, 0
    %1452 = vmatprep.subr.mxu0 0.0
    %1453 = vmatpush1.msra.mxu0 0.0
    %1454 = vmatprep.subr.mxu0 0.0
    %1455 = vmatpush1.msra.mxu0 0.0
    %1456 = vmatprep.subr.mxu0 0.0
    %1457 = vmatpush1.msra.mxu0 0.0
    %1458 = vmatprep.subr.mxu0 0.0
    %1459 = vmatpush1.msra.mxu0 0.0
    %1460 = vmatprep.subr.mxu0 0.0
    %1461 = vmatpush1.msra.mxu0 0.0
    %1462 = vmatprep.subr.mxu0 0.0
    %1463 = vmatpush1.msra.mxu0 0.0
    %1464 = vmatprep.subr.mxu0 0.0
    %1465 = vmatpush1.msra.mxu0 0.0
    %1466 = vmatprep.subr.mxu0 0.0
    %1467 = vmatpush1.msra.mxu0 0.0
    %1468 = vmatprep.subr.mxu0 0.0
    %1469 = vmatpush1.msra.mxu0 0.0
    %1470 = vmatprep.subr.mxu0 0.0
    %1471 = vmatpush1.msra.mxu0 0.0
    %1472 = vmatprep.subr.mxu0 0.0
    %1473 = vmatpush1.msra.mxu0 0.0
    %1474 = vmatprep.subr.mxu0 0.0
    %1475 = vmatpush1.msra.mxu0 0.0
    %1476 = vmatprep.subr.mxu0 0.0
    %1477 = vmatpush1.msra.mxu0 %v1279
    %1478 = vmatprep.subr.mxu0 0.0
    %1479 = vmatpush1.msra.mxu0 %v1278
    %1480 = vmatprep.subr.mxu0 0.0
    %1481 = vmatpush1.msra.mxu0 %v1277
    %1482 = vmatprep.subr.mxu0 0.0
    %1483 = vmatpush1.msra.mxu0 %v1276
    %1484 = vmatprep.subr.mxu0 0.0
    %1485 = vmatpush2.msra.mxu0 0.0
    %1486 = vmatprep.subr.mxu0 0.0
    %1487 = vmatpush2.msra.mxu0 0.0
    %1488 = vmatprep.subr.mxu0 0.0
    %1489 = vmatpush2.msra.mxu0 0.0
    %1490 = vmatprep.subr.mxu0 0.0
    %1491 = vmatpush2.msra.mxu0 0.0
    %1492 = vmatprep.subr.mxu0 0.0
    %1493 = vmatpush2.msra.mxu0 0.0
    %1494 = vmatprep.subr.mxu0 0.0
    %1495 = vmatpush2.msra.mxu0 0.0
    %1496 = vmatprep.subr.mxu0 0.0
    %1497 = vmatpush2.msra.mxu0 0.0
    %1498 = vmatprep.subr.mxu0 0.0
    %1499 = vmatpush2.msra.mxu0 0.0
    %1500 = vmatprep.subr.mxu0 0.0
    %1501 = vmatpush2.msra.mxu0 0.0
    %1502 = vmatprep.subr.mxu0 0.0
    %1503 = vmatpush2.msra.mxu0 0.0
    %1504 = vmatprep.subr.mxu0 0.0
    %1505 = vmatpush2.msra.mxu0 0.0
    %1506 = vmatprep.subr.mxu0 0.0
    %1507 = vmatpush2.msra.mxu0 0.0
    %1508 = vmatprep.subr.mxu0 0.0
    %1509 = vmatpush2.msra.mxu0 0.0
    %1510 = vmatprep.subr.mxu0 0.0
    %1511 = vmatpush2.msra.mxu0 0.0
    %1512 = vmatprep.subr.mxu0 0.0
    %1513 = vmatpush2.msra.mxu0 0.0
    %1514 = vmatprep.subr.mxu0 0.0
    %1515 = vmatpush2.msra.mxu0 0.0
    %1516 = vmatprep.mubr.f32.mxu0 0.0
    %1517 = vmatmul.mubr.f32.gmra.mxu0 %v1447
    %v1518 = vpop.f32.mrf.mxu0
    %v1519 = vadd.f32 0.0, %v1518
    %v1520 = vpop.f32.mrf.mxu0
    %1521 = vmatprep.mubr.f32.mxu0 0.0
    %1522 = vmatmul.mubr.f32.gmra.mxu0 %v1450
    %v1523 = vpop.f32.mrf.mxu0
    %v1524 = vadd.f32 0.0, %v1523
    %v1525 = vpop.f32.mrf.mxu0
    %1526 = vdwg.mxu0
    %v1527 = vadd.f32 %v1438, %v1519
    %v1528 = vadd.f32 %v1443, %v1524
    %v1530 = vsel %vm70, %v1260, 0
    %v1533 = vsel %vm70, %v1265, 0
    %1535 = vmatprep.subr.mxu0 0.0
    %1536 = vmatpush1.msra.mxu0 0.0
    %1537 = vmatprep.subr.mxu0 0.0
    %1538 = vmatpush1.msra.mxu0 0.0
    %1539 = vmatprep.subr.mxu0 0.0
    %1540 = vmatpush1.msra.mxu0 0.0
    %1541 = vmatprep.subr.mxu0 0.0
    %1542 = vmatpush1.msra.mxu0 0.0
    %1543 = vmatprep.subr.mxu0 0.0
    %1544 = vmatpush1.msra.mxu0 0.0
    %1545 = vmatprep.subr.mxu0 0.0
    %1546 = vmatpush1.msra.mxu0 0.0
    %1547 = vmatprep.subr.mxu0 0.0
    %1548 = vmatpush1.msra.mxu0 0.0
    %1549 = vmatprep.subr.mxu0 0.0
    %1550 = vmatpush1.msra.mxu0 0.0
    %1551 = vmatprep.subr.mxu0 0.0
    %1552 = vmatpush1.msra.mxu0 0.0
    %1553 = vmatprep.subr.mxu0 0.0
    %1554 = vmatpush1.msra.mxu0 0.0
    %1555 = vmatprep.subr.mxu0 0.0
    %1556 = vmatpush1.msra.mxu0 0.0
    %1557 = vmatprep.subr.mxu0 0.0
    %1558 = vmatpush1.msra.mxu0 0.0
    %1559 = vmatprep.subr.mxu0 0.0
    %1560 = vmatpush1.msra.mxu0 %v1283
    %1561 = vmatprep.subr.mxu0 0.0
    %1562 = vmatpush1.msra.mxu0 %v1282
    %1563 = vmatprep.subr.mxu0 0.0
    %1564 = vmatpush1.msra.mxu0 %v1281
    %1565 = vmatprep.subr.mxu0 0.0
    %1566 = vmatpush1.msra.mxu0 %v1280
    %1567 = vmatprep.subr.mxu0 0.0
    %1568 = vmatpush2.msra.mxu0 0.0
    %1569 = vmatprep.subr.mxu0 0.0
    %1570 = vmatpush2.msra.mxu0 0.0
    %1571 = vmatprep.subr.mxu0 0.0
    %1572 = vmatpush2.msra.mxu0 0.0
    %1573 = vmatprep.subr.mxu0 0.0
    %1574 = vmatpush2.msra.mxu0 0.0
    %1575 = vmatprep.subr.mxu0 0.0
    %1576 = vmatpush2.msra.mxu0 0.0
    %1577 = vmatprep.subr.mxu0 0.0
    %1578 = vmatpush2.msra.mxu0 0.0
    %1579 = vmatprep.subr.mxu0 0.0
    %1580 = vmatpush2.msra.mxu0 0.0
    %1581 = vmatprep.subr.mxu0 0.0
    %1582 = vmatpush2.msra.mxu0 0.0
    %1583 = vmatprep.subr.mxu0 0.0
    %1584 = vmatpush2.msra.mxu0 0.0
    %1585 = vmatprep.subr.mxu0 0.0
    %1586 = vmatpush2.msra.mxu0 0.0
    %1587 = vmatprep.subr.mxu0 0.0
    %1588 = vmatpush2.msra.mxu0 0.0
    %1589 = vmatprep.subr.mxu0 0.0
    %1590 = vmatpush2.msra.mxu0 0.0
    %1591 = vmatprep.subr.mxu0 0.0
    %1592 = vmatpush2.msra.mxu0 0.0
    %1593 = vmatprep.subr.mxu0 0.0
    %1594 = vmatpush2.msra.mxu0 0.0
    %1595 = vmatprep.subr.mxu0 0.0
    %1596 = vmatpush2.msra.mxu0 0.0
    %1597 = vmatprep.subr.mxu0 0.0
    %1598 = vmatpush2.msra.mxu0 0.0
    %1599 = vmatprep.mubr.f32.mxu0 0.0
    %1600 = vmatmul.mubr.f32.gmra.mxu0 %v1530
    %v1601 = vpop.f32.mrf.mxu0
    %v1602 = vadd.f32 0.0, %v1601
    %v1603 = vpop.f32.mrf.mxu0
    %1604 = vmatprep.mubr.f32.mxu0 0.0
    %1605 = vmatmul.mubr.f32.gmra.mxu0 %v1533
    %v1606 = vpop.f32.mrf.mxu0
    %v1607 = vadd.f32 0.0, %v1606
    %v1608 = vpop.f32.mrf.mxu0
    %1609 = vdwg.mxu0
    %v1610 = vadd.f32 %v1527, %v1602
    %v1611 = vadd.f32 %v1528, %v1607
    %v1612 = vld [vmem:[%s8] sm:$0x1]
    %v1614 = vlaneseq
    %v1615 = vshrl.u32 %v1614, 7
    %v1616 = vsub.s32 0, %v1615
    %v1617 = vrot.slane %v1612, %v1616
    %v1619 = vadd.f32 %v1610, %v1617
    %v1620 = vadd.f32 %v1611, %v1617
    %v1621 = vadd.f32 %v57, %v1619
    %v1622 = vadd.f32 %v58, %v1620
    %v1623 = vsel %vm70, %v1621, 0.0
    %1624 = vadd.xlane.f32.xlu0 %v1623
    %v1625 = vpop.xlane.xlu0 %1624
    %v1626 = vsel %vm70, %v1622, 0.0
    %1627 = vadd.xlane.f32.xlu0 %v1626
    %v1628 = vpop.xlane.xlu0 %1627
    %v1629 = vrcp.pop 32.0
    %v1630 = vmul.f32 %v1625, %v1629
    %v1631 = vmul.f32 %v1628, %v1629
    %v1632 = vsub.f32 %v1621, %v1630
    %v1633 = vsub.f32 %v1622, %v1631
    %v1634 = vld [vmem:[%s9] sm:$0x1]
    %v1635 = vmul.f32 %v1632, %v1632
    %v1636 = vmul.f32 %v1633, %v1633
    %v1637 = vsel %vm70, %v1635, 0.0
    %1638 = vadd.xlane.f32.xlu0 %v1637
    %v1639 = vpop.xlane.xlu0 %1638
    %v1640 = vsel %vm70, %v1636, 0.0
    %1641 = vadd.xlane.f32.xlu0 %v1640
    %v1642 = vpop.xlane.xlu0 %1641
    %v1643 = vmul.f32 %v1639, %v1629
    %v1644 = vmul.f32 %v1642, %v1629
    %v1645 = vadd.f32 %v1643, 1e-05
    %v1646 = vadd.f32 %v1644, 1e-05
    %v1647 = vrsqrt.pop %v1645
    %v1648 = vrsqrt.pop %v1646
    %v1649 = vmul.f32 %v1632, %v1647
    %v1650 = vmul.f32 %v1633, %v1648
    %v1652 = vlaneseq
    %v1653 = vshrl.u32 %v1652, 7
    %v1654 = vsub.s32 0, %v1653
    %v1655 = vrot.slane %v1634, %v1654
    %v1657 = vmul.f32 %v1655, %v1649
    %v1658 = vmul.f32 %v1655, %v1650
    %v1659 = vld [vmem:[%s10] sm:$0x1]
    %v1661 = vlaneseq
    %v1662 = vshrl.u32 %v1661, 7
    %v1663 = vsub.s32 0, %v1662
    %v1664 = vrot.slane %v1659, %v1663
    %v1666 = vadd.f32 %v1657, %v1664
    %v1667 = vadd.f32 %v1658, %v1664
    %v1668 = vld [vmem:[%s11] sm:$0xff]
    %v1669 = vld [vmem:[%s11 + $0x8] sm:$0xff]
    %v1670 = vld [vmem:[%s11 + $0x10] sm:$0xff]
    %v1671 = vld [vmem:[%s11 + $0x18] sm:$0xff]
    %v1672 = vld [vmem:[%s12] sm:$0x1]
    %v1674 = vlaneseq
    %v1675 = vshrl.u32 %v1674, 7
    %v1676 = vsub.s32 0, %v1675
    %v1677 = vrot.slane %v1672, %v1676
    %v1680 = vsel %vm70, %v1666, 0
    %v1683 = vsel %vm70, %v1667, 0
    %1685 = vmatprep.subr.mxu0 0.0
    %1686 = vmatpush1.msra.mxu0 0.0
    %1687 = vmatprep.subr.mxu0 0.0
    %1688 = vmatpush1.msra.mxu0 0.0
    %1689 = vmatprep.subr.mxu0 0.0
    %1690 = vmatpush1.msra.mxu0 0.0
    %1691 = vmatprep.subr.mxu0 0.0
    %1692 = vmatpush1.msra.mxu0 0.0
    %1693 = vmatprep.subr.mxu0 0.0
    %1694 = vmatpush1.msra.mxu0 0.0
    %1695 = vmatprep.subr.mxu0 0.0
    %1696 = vmatpush1.msra.mxu0 0.0
    %1697 = vmatprep.subr.mxu0 0.0
    %1698 = vmatpush1.msra.mxu0 0.0
    %1699 = vmatprep.subr.mxu0 0.0
    %1700 = vmatpush1.msra.mxu0 0.0
    %1701 = vmatprep.subr.mxu0 0.0
    %1702 = vmatpush1.msra.mxu0 0.0
    %1703 = vmatprep.subr.mxu0 0.0
    %1704 = vmatpush1.msra.mxu0 0.0
    %1705 = vmatprep.subr.mxu0 0.0
    %1706 = vmatpush1.msra.mxu0 0.0
    %1707 = vmatprep.subr.mxu0 0.0
    %1708 = vmatpush1.msra.mxu0 0.0
    %1709 = vmatprep.subr.mxu0 0.0
    %1710 = vmatpush1.msra.mxu0 %v1671
    %1711 = vmatprep.subr.mxu0 0.0
    %1712 = vmatpush1.msra.mxu0 %v1670
    %1713 = vmatprep.subr.mxu0 0.0
    %1714 = vmatpush1.msra.mxu0 %v1669
    %1715 = vmatprep.subr.mxu0 0.0
    %1716 = vmatpush1.msra.mxu0 %v1668
    %1717 = vmatprep.subr.mxu0 0.0
    %1718 = vmatpush2.msra.mxu0 0.0
    %1719 = vmatprep.subr.mxu0 0.0
    %1720 = vmatpush2.msra.mxu0 0.0
    %1721 = vmatprep.subr.mxu0 0.0
    %1722 = vmatpush2.msra.mxu0 0.0
    %1723 = vmatprep.subr.mxu0 0.0
    %1724 = vmatpush2.msra.mxu0 0.0
    %1725 = vmatprep.subr.mxu0 0.0
    %1726 = vmatpush2.msra.mxu0 0.0
    %1727 = vmatprep.subr.mxu0 0.0
    %1728 = vmatpush2.msra.mxu0 0.0
    %1729 = vmatprep.subr.mxu0 0.0
    %1730 = vmatpush2.msra.mxu0 0.0
    %1731 = vmatprep.subr.mxu0 0.0
    %1732 = vmatpush2.msra.mxu0 0.0
    %1733 = vmatprep.subr.mxu0 0.0
    %1734 = vmatpush2.msra.mxu0 0.0
    %1735 = vmatprep.subr.mxu0 0.0
    %1736 = vmatpush2.msra.mxu0 0.0
    %1737 = vmatprep.subr.mxu0 0.0
    %1738 = vmatpush2.msra.mxu0 0.0
    %1739 = vmatprep.subr.mxu0 0.0
    %1740 = vmatpush2.msra.mxu0 0.0
    %1741 = vmatprep.subr.mxu0 0.0
    %1742 = vmatpush2.msra.mxu0 0.0
    %1743 = vmatprep.subr.mxu0 0.0
    %1744 = vmatpush2.msra.mxu0 0.0
    %1745 = vmatprep.subr.mxu0 0.0
    %1746 = vmatpush2.msra.mxu0 0.0
    %1747 = vmatprep.subr.mxu0 0.0
    %1748 = vmatpush2.msra.mxu0 0.0
    %1749 = vmatprep.mubr.f32.mxu0 0.0
    %1750 = vmatmul.mubr.f32.gmra.mxu0 %v1680
    %v1751 = vpop.f32.mrf.mxu0
    %v1752 = vadd.f32 %v1677, %v1751
    %v1753 = vpop.f32.mrf.mxu0
    %1754 = vmatprep.mubr.f32.mxu0 0.0
    %1755 = vmatmul.mubr.f32.gmra.mxu0 %v1683
    %v1756 = vpop.f32.mrf.mxu0
    %v1757 = vadd.f32 %v1677, %v1756
    %v1758 = vpop.f32.mrf.mxu0
    %1759 = vdwg.mxu0
    %v1760 = vmax.f32 %v1752, 0.0
    %v1761 = vmax.f32 %v1757, 0.0
    %v1762 = vld [vmem:[%s13] sm:$0xff]
    %v1763 = vld [vmem:[%s13 + $0x8] sm:$0xff]
    %v1764 = vld [vmem:[%s13 + $0x10] sm:$0xff]
    %v1765 = vld [vmem:[%s13 + $0x18] sm:$0xff]
    %v1766 = vld [vmem:[%s13 + $0x20] sm:$0xff]
    %v1767 = vld [vmem:[%s13 + $0x28] sm:$0xff]
    %v1768 = vld [vmem:[%s13 + $0x30] sm:$0xff]
    %v1769 = vld [vmem:[%s13 + $0x38] sm:$0xff]
    %v1770 = vld [vmem:[%s13 + $0x40] sm:$0xff]
    %v1771 = vld [vmem:[%s13 + $0x48] sm:$0xff]
    %v1772 = vld [vmem:[%s13 + $0x50] sm:$0xff]
    %v1773 = vld [vmem:[%s13 + $0x58] sm:$0xff]
    %v1774 = vld [vmem:[%s13 + $0x60] sm:$0xff]
    %v1775 = vld [vmem:[%s13 + $0x68] sm:$0xff]
    %v1776 = vld [vmem:[%s13 + $0x70] sm:$0xff]
    %v1777 = vld [vmem:[%s13 + $0x78] sm:$0xff]
    %v1778 = vld [vmem:[%s14] sm:$0x1]
    %v1780 = vlaneseq
    %v1781 = vshrl.u32 %v1780, 7
    %v1782 = vsub.s32 0, %v1781
    %v1783 = vrot.slane %v1778, %v1782
    %1785 = vmatprep.subr.mxu0 0.0
    %1786 = vmatpush1.msra.mxu0 %v1777
    %1787 = vmatprep.subr.mxu0 0.0
    %1788 = vmatpush1.msra.mxu0 %v1776
    %1789 = vmatprep.subr.mxu0 0.0
    %1790 = vmatpush1.msra.mxu0 %v1775
    %1791 = vmatprep.subr.mxu0 0.0
    %1792 = vmatpush1.msra.mxu0 %v1774
    %1793 = vmatprep.subr.mxu0 0.0
    %1794 = vmatpush1.msra.mxu0 %v1773
    %1795 = vmatprep.subr.mxu0 0.0
    %1796 = vmatpush1.msra.mxu0 %v1772
    %1797 = vmatprep.subr.mxu0 0.0
    %1798 = vmatpush1.msra.mxu0 %v1771
    %1799 = vmatprep.subr.mxu0 0.0
    %1800 = vmatpush1.msra.mxu0 %v1770
    %1801 = vmatprep.subr.mxu0 0.0
    %1802 = vmatpush1.msra.mxu0 %v1769
    %1803 = vmatprep.subr.mxu0 0.0
    %1804 = vmatpush1.msra.mxu0 %v1768
    %1805 = vmatprep.subr.mxu0 0.0
    %1806 = vmatpush1.msra.mxu0 %v1767
    %1807 = vmatprep.subr.mxu0 0.0
    %1808 = vmatpush1.msra.mxu0 %v1766
    %1809 = vmatprep.subr.mxu0 0.0
    %1810 = vmatpush1.msra.mxu0 %v1765
    %1811 = vmatprep.subr.mxu0 0.0
    %1812 = vmatpush1.msra.mxu0 %v1764
    %1813 = vmatprep.subr.mxu0 0.0
    %1814 = vmatpush1.msra.mxu0 %v1763
    %1815 = vmatprep.subr.mxu0 0.0
    %1816 = vmatpush1.msra.mxu0 %v1762
    %1817 = vmatprep.subr.mxu0 0.0
    %1818 = vmatpush2.msra.mxu0 0.0
    %1819 = vmatprep.subr.mxu0 0.0
    %1820 = vmatpush2.msra.mxu0 0.0
    %1821 = vmatprep.subr.mxu0 0.0
    %1822 = vmatpush2.msra.mxu0 0.0
    %1823 = vmatprep.subr.mxu0 0.0
    %1824 = vmatpush2.msra.mxu0 0.0
    %1825 = vmatprep.subr.mxu0 0.0
    %1826 = vmatpush2.msra.mxu0 0.0
    %1827 = vmatprep.subr.mxu0 0.0
    %1828 = vmatpush2.msra.mxu0 0.0
    %1829 = vmatprep.subr.mxu0 0.0
    %1830 = vmatpush2.msra.mxu0 0.0
    %1831 = vmatprep.subr.mxu0 0.0
    %1832 = vmatpush2.msra.mxu0 0.0
    %1833 = vmatprep.subr.mxu0 0.0
    %1834 = vmatpush2.msra.mxu0 0.0
    %1835 = vmatprep.subr.mxu0 0.0
    %1836 = vmatpush2.msra.mxu0 0.0
    %1837 = vmatprep.subr.mxu0 0.0
    %1838 = vmatpush2.msra.mxu0 0.0
    %1839 = vmatprep.subr.mxu0 0.0
    %1840 = vmatpush2.msra.mxu0 0.0
    %1841 = vmatprep.subr.mxu0 0.0
    %1842 = vmatpush2.msra.mxu0 0.0
    %1843 = vmatprep.subr.mxu0 0.0
    %1844 = vmatpush2.msra.mxu0 0.0
    %1845 = vmatprep.subr.mxu0 0.0
    %1846 = vmatpush2.msra.mxu0 0.0
    %1847 = vmatprep.subr.mxu0 0.0
    %1848 = vmatpush2.msra.mxu0 0.0
    %1849 = vmatprep.mubr.f32.mxu0 0.0
    %1850 = vmatmul.mubr.f32.gmra.mxu0 %v1760
    %v1851 = vpop.f32.mrf.mxu0
    %v1852 = vadd.f32 %v1783, %v1851
    %v1853 = vpop.f32.mrf.mxu0
    %1854 = vmatprep.mubr.f32.mxu0 0.0
    %1855 = vmatmul.mubr.f32.gmra.mxu0 %v1761
    %v1856 = vpop.f32.mrf.mxu0
    %v1857 = vadd.f32 %v1783, %v1856
    %v1858 = vpop.f32.mrf.mxu0
    %1859 = vdwg.mxu0
    %v1860 = vadd.f32 %v1666, %v1852
    %v1861 = vadd.f32 %v1667, %v1857
    %v1862 = vsel %vm70, %v1860, 0.0
    %1863 = vadd.xlane.f32.xlu0 %v1862
    %v1864 = vpop.xlane.xlu0 %1863
    %v1865 = vsel %vm70, %v1861, 0.0
    %1866 = vadd.xlane.f32.xlu0 %v1865
    %v1867 = vpop.xlane.xlu0 %1866
    %v1868 = vmul.f32 %v1864, %v1629
    %v1869 = vmul.f32 %v1867, %v1629
    %v1870 = vsub.f32 %v1860, %v1868
    %v1871 = vsub.f32 %v1861, %v1869
    %v1872 = vld [vmem:[%s15] sm:$0x1]
    %v1873 = vmul.f32 %v1870, %v1870
    %v1874 = vmul.f32 %v1871, %v1871
    %v1875 = vsel %vm70, %v1873, 0.0
    %1876 = vadd.xlane.f32.xlu0 %v1875
    %v1877 = vpop.xlane.xlu0 %1876
    %v1878 = vsel %vm70, %v1874, 0.0
    %1879 = vadd.xlane.f32.xlu0 %v1878
    %v1880 = vpop.xlane.xlu0 %1879
    %v1881 = vmul.f32 %v1877, %v1629
    %v1882 = vmul.f32 %v1880, %v1629
    %v1883 = vadd.f32 %v1881, 1e-05
    %v1884 = vadd.f32 %v1882, 1e-05
    %v1885 = vrsqrt.pop %v1883
    %v1886 = vrsqrt.pop %v1884
    %v1887 = vmul.f32 %v1870, %v1885
    %v1888 = vmul.f32 %v1871, %v1886
    %v1890 = vlaneseq
    %v1891 = vshrl.u32 %v1890, 7
    %v1892 = vsub.s32 0, %v1891
    %v1893 = vrot.slane %v1872, %v1892
    %v1895 = vmul.f32 %v1893, %v1887
    %v1896 = vmul.f32 %v1893, %v1888
    %v1897 = vld [vmem:[%s16] sm:$0x1]
    %v1899 = vlaneseq
    %v1900 = vshrl.u32 %v1899, 7
    %v1901 = vsub.s32 0, %v1900
    %v1902 = vrot.slane %v1897, %v1901
    %v1904 = vadd.f32 %v1895, %v1902
    %v1905 = vadd.f32 %v1896, %v1902
    %1906 = vst.msk [vmem:[#allocation2] sm:$0xff] %vm70, %v1904
    %1907 = vst.msk [vmem:[#allocation2 + $0x8] sm:$0xff] %vm70, %v1905
    // Predicated region
    $region70: #{tpu_custom_call.1} parent=1 // pred_check
      _
    $region71: #{tpu_custom_call.1} parent=1 // pred_check_branch
      %1909 = sbr.rel (0) target = $region73
    $region72: #{tpu_custom_call.1} parent=1 // pred_region
      %s1911 = ssub.s32 256, 256
      %1912 = vsyncadd [#allocation3], %s1911
      %s1913 = sshll.u32 [#allocation2], 4
      %s1914 = int_to_ptr.vmem [resolvable:$true] %s1913
      %1919 = dma.vmem_to_hbm [thread:$0]  %s1914, 256, %s17, [#allocation3], 128, 128, 8
    $region73: #{tpu_custom_call.1} parent=1 // pred_fallthru
      _
    // Predicated region
    $region74: #{tpu_custom_call.1} parent=1 // pred_check
      _
    $region75: #{tpu_custom_call.1} parent=1 // pred_check_branch
      %1921 = sbr.rel (0) target = $region77
    $region76: #{tpu_custom_call.1} parent=1 // pred_region
      %1922 = dma.done [#allocation3], 256
    $region77: #{tpu_custom_call.1} parent=1 // pred_fallthru
      _
    %1923 = vsyncpa [#allocation3], 1

</llo_original>
